<compile_context>
chip_gen: v7x
topology: tpu7x:2x2x1
jax: 0.10.0
libtpu: 0.0.40
codegen_flags: <defaults>
</compile_context>

<pallas_src>
import functools
import math

import jax
import jax.numpy as jnp
from jax.experimental import pallas as pl
from jax.experimental.pallas import tpu as pltpu

NEG_INF = -1000000.0        # matches the reference module's NEG_INF
LN_EPS = 1e-5


# ----------------------------- chip / budget helpers -------------------------
@functools.lru_cache(maxsize=1)
def _vmem_limit_bytes():
    try:
        cap = int(pltpu.get_tpu_info().vmem_capacity_bytes)
        return int(min(max(cap * 3 // 4, 32 * 1024 * 1024), 100 * 1024 * 1024))
    except Exception:
        return 48 * 1024 * 1024


def _compiler_params(dims):
    return pltpu.CompilerParams(dimension_semantics=dims,
                                vmem_limit_bytes=_vmem_limit_bytes())


def _attn_vmem_bytes(wt, n, c, heads, has_mask):
    """Rough per-grid-step VMEM footprint of the attention kernel."""
    f32, b16 = 4, 2
    tok = wt * n
    io = 2 * tok * c * f32 * 2                               # x in + out, double-buffered
    if has_mask:
        io += wt * n * f32 * 2
    weights = (c * 3 * c * b16 + c * c * b16 + heads * n * n * f32) * 2
    interm = (tok * c * f32                                  # LN output
              + tok * 3 * c * (f32 + b16)                    # qkv f32 + bf16
              + 3 * wt * n * n * f32                         # scores / exp / attn
              + tok * c * (2 * f32 + b16))                   # head concat + proj acc
    return io + weights + interm


def _pick_wt_sda(nww, g, wp, n, c, heads, has_mask, budget):
    """Windows per grid step along the width axis (SDA).  Wt | nWw and the
    block's second-minor dim Wt*G must be 8-aligned or equal Wp."""
    aligned = [wt for wt in range(1, nww + 1)
               if nww % wt == 0 and ((wt * g) % 8 == 0 or wt * g == wp)]
    if not aligned:
        return nww
    good = [wt for wt in aligned
            if _attn_vmem_bytes(wt, n, c, heads, has_mask) <= budget and wt * n <= 4096]
    return max(good) if good else min(aligned)


def _pick_wt_lda(b_, ng, n, c, heads, has_mask, budget):
    base = ng if has_mask else b_
    divs = [wt for wt in range(1, base + 1) if base % wt == 0]
    good = [wt for wt in divs
            if _attn_vmem_bytes(wt, n, c, heads, has_mask) <= budget and wt * n <= 4096]
    return max(good) if good else 1


def _mlp_row_plan(rows, c, hidden, limit):
    """Row tile for the fused residual+LN2+MLP kernel, sized against VMEM.
    Falls back to padding the row count when no 8-aligned divisor exists."""
    budget = int(limit * 0.7)
    weights = (c * hidden * 2 + hidden * c * 2) * 2 + (4 * c + hidden) * 4
    per_row = 3 * c * 4 * 2 + 4 * c * 4 + 6 * hidden
    cap = max(8, (budget - weights) // max(per_row, 1))
    cap = min(cap, 1024)
    cap -= cap % 8
    cap = max(cap, 8)
    if rows <= cap:
        return rows, rows
    for t in range(cap, 7, -8):
        if rows % t == 0:
            return t, rows
    rt = cap
    return rt, ((rows + rt - 1) // rt) * rt


# --------------------------- in-kernel math helpers --------------------------
def _layernorm(x, gamma, beta, eps=LN_EPS):
    mu = jnp.mean(x, axis=-1, keepdims=True)
    var = jnp.mean((x - mu) * (x - mu), axis=-1, keepdims=True)
    return (x - mu) * jax.lax.rsqrt(var + eps) * gamma + beta


def _erf(x):
    # float32-accurate erf (Abramowitz & Stegun 7.1.26, |err| < 1.5e-7).
    a1, a2, a3, a4, a5 = 0.254829592, -0.284496736, 1.421413741, -1.453152027, 1.061405429
    p = 0.3275911
    ax = jnp.abs(x)
    t = 1.0 / (1.0 + p * ax)
    poly = ((((a5 * t + a4) * t + a3) * t + a2) * t + a1) * t
    y = 1.0 - poly * jnp.exp(-ax * ax)
    return jnp.where(x >= 0, y, -y)


def _gelu_exact(x):
    # matches torch nn.GELU() (erf formulation)
    return 0.5 * x * (1.0 + _erf(x * (1.0 / math.sqrt(2.0))))


# ------------------------- DynamicPosBias (plain JAX) -------------------------
def dynamic_pos_bias(biases, p):
    """Tiny MLP (4 linears + 3 LN+ReLU) on (M, 2) — left to XLA on purpose
    (lane widths of 2..num_heads make a dedicated kernel pure overhead)."""
    def ln(v, g, b):
        mu = v.mean(-1, keepdims=True)
        var = ((v - mu) ** 2).mean(-1, keepdims=True)
        return (v - mu) * jax.lax.rsqrt(var + LN_EPS) * g + b

    pos = biases @ p['pos_proj_w'] + p['pos_proj_b']
    pos = jnp.maximum(ln(pos, p['pos1_ln_g'], p['pos1_ln_b']), 0.0) @ p['pos1_w'] + p['pos1_b']
    pos = jnp.maximum(ln(pos, p['pos2_ln_g'], p['pos2_ln_b']), 0.0) @ p['pos2_w'] + p['pos2_b']
    pos = jnp.maximum(ln(pos, p['pos3_ln_g'], p['pos3_ln_b']), 0.0) @ p['pos3_w'] + p['pos3_b']
    return pos  # (M, num_heads)


def _rel_pos_bias(Gh, Gw, p, num_heads):
    ph = jnp.arange(1 - Gh, Gh, dtype=jnp.float32)
    pw = jnp.arange(1 - Gw, Gw, dtype=jnp.float32)
    biases = jnp.stack(jnp.meshgrid(ph, pw, indexing='ij')).reshape(2, -1).T     # (M, 2)
    ch = jnp.arange(Gh)
    cw = jnp.arange(Gw)
    coords = jnp.stack(jnp.meshgrid(ch, cw, indexing='ij')).reshape(2, -1)        # (2, N)
    rel = jnp.transpose(coords[:, :, None] - coords[:, None, :], (1, 2, 0))
    rel = rel + jnp.array([Gh - 1, Gw - 1], dtype=rel.dtype)
    rel = rel * jnp.array([2 * Gw - 1, 1], dtype=rel.dtype)
    rpi = rel.sum(-1)                                                             # (N, N)
    pos = dynamic_pos_bias(biases, p)                                             # (M, heads)
    N = Gh * Gw
    rpb = jnp.take(pos, rpi.reshape(-1), axis=0).reshape(N, N, num_heads)
    return jnp.transpose(rpb, (2, 0, 1)).astype(jnp.float32)                      # (heads, N, N)


# --------------------------- attention kernel body ---------------------------
def _attention_body(xt, g1, b1, wqkv, bqkv, wp, bp, bias, mask, num_heads):
    """xt: (Wt, N, C) raw tokens.  Fused LN -> QKV -> per-window attention ->
    single output projection.  Returns (Wt, N, C) f32."""
    Wt, N, C = xt.shape
    hd = C // num_heads

    x2 = xt.reshape(Wt * N, C).astype(jnp.float32)
    xn = _layernorm(x2, g1, b1)                                       # norm1 (fused)

    # Fused QKV projection — q columns are pre-scaled via the folded weights.
    qkv = jnp.dot(xn.astype(jnp.bfloat16), wqkv,
                  preferred_element_type=jnp.float32) + bqkv          # (Wt*N, 3C) f32
    qkvb = qkv.astype(jnp.bfloat16)                                   # single cast

    outs = []
    for h in range(num_heads):
        q = qkvb[:, h * hd:(h + 1) * hd].reshape(Wt, N, hd)
        k = qkvb[:, C + h * hd:C + (h + 1) * hd].reshape(Wt, N, hd)
        v = qkvb[:, 2 * C + h * hd:2 * C + (h + 1) * hd].reshape(Wt, N, hd)

        s = jnp.einsum('wqd,wkd->wqk', q, k,
                       preferred_element_type=jnp.float32) + bias[h]  # (Wt, N, N)
        if mask is not None:
            s = s + mask                                              # (Wt, 1, N) bcast
        s = s - jnp.max(s, axis=-1, keepdims=True)
        e = jnp.exp(s)
        a = e * pl.reciprocal(jnp.sum(e, axis=-1, keepdims=True), approx=True)
        outs.append(jnp.einsum('wqk,wkd->wqd', a.astype(jnp.bfloat16), v,
                               preferred_element_type=jnp.float32))   # (Wt, N, hd)

    # Single K=C output projection (no per-head K=hd matmuls).
    o = jnp.concatenate(outs, axis=-1).reshape(Wt * N, C).astype(jnp.bfloat16)
    out = jnp.dot(o, wp, preferred_element_type=jnp.float32) + bp     # (Wt*N, C)
    return out.reshape(Wt, N, C)


def _attn_kernel_sda(x_ref, g_ref, b_ref, wqkv_ref, bqkv_ref, wp_ref, bp_ref,
                     bias_ref, *rest, num_heads, G, has_mask):
    # x_ref: (1, G, Wt*G, C) block of the padded feature map; the window
    # partition and reverse happen in-register here (no HBM transposes).
    if has_mask:
        mask_ref, o_ref = rest
    else:
        (o_ref,) = rest
    C = x_ref.shape[-1]
    Wt = x_ref.shape[2] // G
    N = G * G

    xb = x_ref[...].reshape(G, Wt, G, C)
    xt = jnp.transpose(xb, (1, 0, 2, 3)).reshape(Wt, N, C)            # window partition
    mask = mask_ref[...].reshape(Wt, 1, N) if has_mask else None

    out = _attention_body(xt, g_ref[0], b_ref[0], wqkv_ref[...], bqkv_ref[0],
                          wp_ref[...], bp_ref[0], bias_ref[...], mask, num_heads)

    out = jnp.transpose(out.reshape(Wt, G, G, C), (1, 0, 2, 3))        # window reverse
    o_ref[...] = out.reshape(1, G, Wt * G, C).astype(o_ref.dtype)


def _attn_kernel_lda(x_ref, g_ref, b_ref, wqkv_ref, bqkv_ref, wp_ref, bp_ref,
                     bias_ref, *rest, num_heads, has_mask):
    # x_ref: (Wt, N, C) pre-partitioned windows.
    if has_mask:
        mask_ref, o_ref = rest
        mask = mask_ref[...]
    else:
        (o_ref,) = rest
        mask = None
    out = _attention_body(x_ref[...], g_ref[0], b_ref[0], wqkv_ref[...], bqkv_ref[0],
                          wp_ref[...], bp_ref[0], bias_ref[...], mask, num_heads)
    o_ref[...] = out.astype(o_ref.dtype)


# --------------------------- attention wrappers -------------------------------
def _scaled_qkv(p, C, scale):
    """Fold the qk scale into the q columns of the QKV weight/bias."""
    col = jnp.concatenate([jnp.full((C,), scale, jnp.float32),
                           jnp.ones((2 * C,), jnp.float32)])
    wqkv = (p['qkv_w'] * col[None, :]).astype(jnp.bfloat16)           # (C, 3C)
    bqkv = (p['qkv_b'] * col).reshape(1, 3 * C)                       # f32
    return wqkv, bqkv


def window_attention_sda(xp, rpb, p, *, num_heads, scale, G, mask4=None):
    """SDA path: input is the padded (B, Hp, Wp, C) raw feature map.  norm1,
    window partition, attention and window reverse are all done in-kernel."""
    B, Hp, Wp, C = xp.shape
    N = G * G
    nWh, nWw = Hp // G, Wp // G
    has_mask = mask4 is not None
    budget = int(_vmem_limit_bytes() * 0.7)
    Wt = _pick_wt_sda(nWw, G, Wp, N, C, num_heads, has_mask, budget)

    wqkv, bqkv = _scaled_qkv(p, C, scale)
    wp_ = p['proj_w'].astype(jnp.bfloat16)
    bp_ = p['proj_b'].reshape(1, C)
    g1 = p['norm1_g'].reshape(1, C)
    b1 = p['norm1_b'].reshape(1, C)

    kern = functools.partial(_attn_kernel_sda, num_heads=num_heads, G=G,
                             has_mask=has_mask)
    in_specs = [
        pl.BlockSpec((1, G, Wt * G, C), lambda b, i, j: (b, i, j, 0)),
        pl.BlockSpec((1, C), lambda b, i, j: (0, 0)),
        pl.BlockSpec((1, C), lambda b, i, j: (0, 0)),
        pl.BlockSpec((C, 3 * C), lambda b, i, j: (0, 0)),
        pl.BlockSpec((1, 3 * C), lambda b, i, j: (0, 0)),
        pl.BlockSpec((C, C), lambda b, i, j: (0, 0)),
        pl.BlockSpec((1, C), lambda b, i, j: (0, 0)),
        pl.BlockSpec((num_heads, N, N), lambda b, i, j: (0, 0, 0)),
    ]
    args = [xp, g1, b1, wqkv, bqkv, wp_, bp_, rpb]
    if has_mask:
        in_specs.append(pl.BlockSpec((1, Wt, 1, N), lambda b, i, j: (i, j, 0, 0)))
        args.append(mask4)

    return pl.pallas_call(
        kern,
        out_shape=jax.ShapeDtypeStruct((B, Hp, Wp, C), xp.dtype),
        grid=(B, nWh, nWw // Wt),
        in_specs=in_specs,
        out_specs=pl.BlockSpec((1, G, Wt * G, C), lambda b, i, j: (b, i, j, 0)),
        compiler_params=_compiler_params(("parallel", "parallel", "parallel")),
    )(*args)


def window_attention_lda(xw, rpb, p, *, num_heads, scale, nG, mask_rows=None):
    """LDA path: input is pre-partitioned (B*nG, N, C) raw windows (norm1 is
    still fused in-kernel)."""
    B_, N, C = xw.shape
    has_mask = mask_rows is not None
    budget = int(_vmem_limit_bytes() * 0.7)
    Wt = _pick_wt_lda(B_, nG, N, C, num_heads, has_mask, budget)

    wqkv, bqkv = _scaled_qkv(p, C, scale)
    wp_ = p['proj_w'].astype(jnp.bfloat16)
    bp_ = p['proj_b'].reshape(1, C)
    g1 = p['norm1_g'].reshape(1, C)
    b1 = p['norm1_b'].reshape(1, C)

    kern = functools.partial(_attn_kernel_lda, num_heads=num_heads, has_mask=has_mask)
    in_specs = [
        pl.BlockSpec((Wt, N, C), lambda i: (i, 0, 0)),
        pl.BlockSpec((1, C), lambda i: (0, 0)),
        pl.BlockSpec((1, C), lambda i: (0, 0)),
        pl.BlockSpec((C, 3 * C), lambda i: (0, 0)),
        pl.BlockSpec((1, 3 * C), lambda i: (0, 0)),
        pl.BlockSpec((C, C), lambda i: (0, 0)),
        pl.BlockSpec((1, C), lambda i: (0, 0)),
        pl.BlockSpec((num_heads, N, N), lambda i: (0, 0, 0)),
    ]
    args = [xw, g1, b1, wqkv, bqkv, wp_, bp_, rpb]
    if has_mask:
        nblk = nG // Wt
        in_specs.append(pl.BlockSpec((Wt, 1, N), lambda i: (i % nblk, 0, 0)))
        args.append(mask_rows)

    return pl.pallas_call(
        kern,
        out_shape=jax.ShapeDtypeStruct((B_, N, C), xw.dtype),
        grid=(B_ // Wt,),
        in_specs=in_specs,
        out_specs=pl.BlockSpec((Wt, N, C), lambda i: (i, 0, 0)),
        compiler_params=_compiler_params(("parallel",)),
    )(*args)


# ---------------- fused residual + norm2 + MLP(GELU) + residual kernel --------
def _mlp_kernel(y_ref, a_ref, g_ref, b_ref, w1_ref, b1_ref, w2_ref, b2_ref, o_ref):
    y = y_ref[...].astype(jnp.float32) + a_ref[...].astype(jnp.float32)   # shortcut + attn
    z = _layernorm(y, g_ref[0], b_ref[0])
    h = jnp.dot(z.astype(jnp.bfloat16), w1_ref[...],
                preferred_element_type=jnp.float32) + b1_ref[0]
    h = _gelu_exact(h)
    m = jnp.dot(h.astype(jnp.bfloat16), w2_ref[...],
                preferred_element_type=jnp.float32) + b2_ref[0]
    o_ref[...] = (y + m).astype(o_ref.dtype)


def residual_mlp_rows(shortcut2d, attn2d, p):
    R, C = shortcut2d.shape
    Hd = p['fc1_w'].shape[1]
    rt, R_pad = _mlp_row_plan(R, C, Hd, _vmem_limit_bytes())
    s2, a2 = shortcut2d, attn2d
    if R_pad != R:
        s2 = jnp.pad(s2, ((0, R_pad - R), (0, 0)))
        a2 = jnp.pad(a2, ((0, R_pad - R), (0, 0)))
    w1 = p['fc1_w'].astype(jnp.bfloat16)
    w2 = p['fc2_w'].astype(jnp.bfloat16)
    out = pl.pallas_call(
        _mlp_kernel,
        out_shape=jax.ShapeDtypeStruct((R_pad, C), shortcut2d.dtype),
        grid=(R_pad // rt,),
        in_specs=[
            pl.BlockSpec((rt, C), lambda i: (i, 0)),
            pl.BlockSpec((rt, C), lambda i: (i, 0)),
            pl.BlockSpec((1, C), lambda i: (0, 0)),
            pl.BlockSpec((1, C), lambda i: (0, 0)),
            pl.BlockSpec((C, Hd), lambda i: (0, 0)),
            pl.BlockSpec((1, Hd), lambda i: (0, 0)),
            pl.BlockSpec((Hd, C), lambda i: (0, 0)),
            pl.BlockSpec((1, C), lambda i: (0, 0)),
        ],
        out_specs=pl.BlockSpec((rt, C), lambda i: (i, 0)),
        compiler_params=_compiler_params(("parallel",)),
    )(s2, a2,
      p['norm2_g'].reshape(1, C), p['norm2_b'].reshape(1, C),
      w1, p['fc1_b'].reshape(1, Hd), w2, p['fc2_b'].reshape(1, C))
    return out[:R] if R_pad != R else out


# ------------------------------- CrossFormerBlock ------------------------------
def _pad_mask(Hp, Wp, pad_b, pad_r):
    m = jnp.zeros((1, Hp, Wp, 1), jnp.float32)
    if pad_b > 0:
        m = m.at[:, -pad_b:, :, :].set(-1.0)
    if pad_r > 0:
        m = m.at[:, :, -pad_r:, :].set(-1.0)
    return m


def crossformer_block(x, H, W, p, *, num_heads, group_size, interval, lsda_flag):
    B, L, C = x.shape
    assert L == H * W
    if min(H, W) <= group_size:
        lsda_flag = 0
        group_size = min(H, W)

    shortcut = x
    size_div = interval if lsda_flag == 1 else group_size
    pad_r = (size_div - W % size_div) % size_div
    pad_b = (size_div - H % size_div) % size_div
    padded = (pad_r > 0) or (pad_b > 0)
    Hp, Wp = H + pad_b, W + pad_r
    # norm1 is fused into the attention kernel, so the raw input is padded;
    # the padded rows are masked out as keys and cropped as queries.
    xp = jnp.pad(x.reshape(B, H, W, C), ((0, 0), (0, pad_b), (0, pad_r), (0, 0)))

    hd = C // num_heads
    scale = hd ** (-0.5)

    if lsda_flag == 0:                      # SDA — partition/reverse fused in-kernel
        G = group_size
        Gh = Gw = G
        N = G * G
        nWh, nWw = Hp // G, Wp // G
        mask4 = None
        if padded:
            m = _pad_mask(Hp, Wp, pad_b, pad_r)
            mw = m.reshape(1, nWh, G, nWw, G, 1)
            mw = jnp.transpose(mw, (0, 1, 3, 2, 4, 5)).reshape(nWh, nWw, 1, N)
            mask4 = jnp.where(mw < 0, NEG_INF, 0.0).astype(jnp.float32)
        rpb = _rel_pos_bias(Gh, Gw, p, num_heads)                     # (heads, N, N)
        xo4 = window_attention_sda(xp, rpb, p, num_heads=num_heads, scale=scale,
                                   G=G, mask4=mask4)                   # (B, Hp, Wp, C)
    else:                                   # LDA — strided partition stays in XLA
        # TODO(synk): fold the LDA strided window partition/reverse into the
        # kernel as well (needs Element/strided blocks); kept as XLA transposes.
        I = interval
        Gh, Gw = Hp // I, Wp // I
        N = Gh * Gw
        nG = I * I
        xw = xp.reshape(B, Gh, I, Gw, I, C)
        xw = jnp.transpose(xw, (0, 2, 4, 1, 3, 5)).reshape(B * nG, N, C)
        mask_rows = None
        if padded:
            m = _pad_mask(Hp, Wp, pad_b, pad_r)
            mw = m.reshape(1, Gh, I, Gw, I, 1)
            mw = jnp.transpose(mw, (0, 2, 4, 1, 3, 5)).reshape(nG, 1, N)
            mask_rows = jnp.where(mw < 0, NEG_INF, 0.0).astype(jnp.float32)
        rpb = _rel_pos_bias(Gh, Gw, p, num_heads)
        xo = window_attention_lda(xw, rpb, p, num_heads=num_heads, scale=scale,
                                  nG=nG, mask_rows=mask_rows)          # (B*nG, N, C)
        xo4 = xo.reshape(B, I, I, Gh, Gw, C)
        xo4 = jnp.transpose(xo4, (0, 3, 1, 4, 2, 5)).reshape(B, Hp, Wp, C)

    xo2 = xo4[:, :H, :W, :].reshape(B * L, C)

    # drop_path / dropouts are 0.0 -> identity
    out = residual_mlp_rows(shortcut.reshape(B * L, C), xo2, p)
    return out.reshape(B, L, C)


# ------------------------- plain-JAX reference (for checking) ------------------
def crossformer_block_ref(x, H, W, p, *, num_heads, group_size, interval, lsda_flag):
    B, L, C = x.shape
    if min(H, W) <= group_size:
        lsda_flag = 0
        group_size = min(H, W)

    def ln(v, g, b):
        mu = v.mean(-1, keepdims=True)
        var = ((v - mu) ** 2).mean(-1, keepdims=True)
        return (v - mu) * jax.lax.rsqrt(var + LN_EPS) * g.reshape(-1) + b.reshape(-1)

    shortcut = x
    xn = ln(x, p['norm1_g'], p['norm1_b']).reshape(B, H, W, C)
    size_div = interval if lsda_flag == 1 else group_size
    pad_r = (size_div - W % size_div) % size_div
    pad_b = (size_div - H % size_div) % size_div
    xp = jnp.pad(xn, ((0, 0), (0, pad_b), (0, pad_r), (0, 0)))
    Hp, Wp = H + pad_b, W + pad_r
    m = jnp.zeros((1, Hp, Wp, 1), jnp.float32)
    if pad_b > 0:
        m = m.at[:, -pad_b:, :, :].set(-1.0)
    if pad_r > 0:
        m = m.at[:, :, -pad_r:, :].set(-1.0)
    if lsda_flag == 0:
        G = group_size
        Gh = Gw = G
        nG = Hp * Wp // (G * G)
        xw = xp.reshape(B, Hp // G, G, Wp // G, G, C).transpose(0, 1, 3, 2, 4, 5).reshape(B * nG, G * G, C)
        mw = m.reshape(1, Hp // G, G, Wp // G, G, 1).transpose(0, 1, 3, 2, 4, 5).reshape(nG, 1, G * G)
    else:
        I = interval
        Gh, Gw = Hp // I, Wp // I
        nG = I * I
        xw = xp.reshape(B, Gh, I, Gw, I, C).transpose(0, 2, 4, 1, 3, 5).reshape(B * nG, Gh * Gw, C)
        mw = m.reshape(1, Gh, I, Gw, I, 1).transpose(0, 2, 4, 1, 3, 5).reshape(nG, 1, Gh * Gw)
    N = Gh * Gw
    hd = C // num_heads
    scale = hd ** (-0.5)
    B_ = xw.shape[0]

    qkv = (xw @ p['qkv_w'] + p['qkv_b']).reshape(B_, N, 3, num_heads, hd).transpose(2, 0, 3, 1, 4)
    q, k, v = qkv[0] * scale, qkv[1], qkv[2]
    attn = jnp.einsum('bhnd,bhmd->bhnm', q, k)
    attn = attn + _rel_pos_bias(Gh, Gw, p, num_heads)[None]
    if pad_r > 0 or pad_b > 0:
        amask = jnp.where(jnp.broadcast_to(mw, (nG, N, N)) < 0, NEG_INF, 0.0)
        attn = attn.reshape(B, nG, num_heads, N, N) + amask[None, :, None]
        attn = attn.reshape(B_, num_heads, N, N)
    attn = jax.nn.softmax(attn, axis=-1)
    xo = jnp.einsum('bhnm,bhmd->bhnd', attn, v).transpose(0, 2, 1, 3).reshape(B_, N, C)
    xo = xo @ p['proj_w'] + p['proj_b']
    if lsda_flag == 0:
        G = group_size
        xo = xo.reshape(B, Hp // G, Wp // G, G, G, C).transpose(0, 1, 3, 2, 4, 5).reshape(B, Hp, Wp, C)
    else:
        I = interval
        xo = xo.reshape(B, I, I, Gh, Gw, C).transpose(0, 3, 1, 4, 2, 5).reshape(B, Hp, Wp, C)
    xo = xo[:, :H, :W, :].reshape(B, L, C)
    y = shortcut + xo
    z = ln(y, p['norm2_g'], p['norm2_b'])
    h = jax.nn.gelu(z @ p['fc1_w'] + p['fc1_b'], approximate=False)
    return y + h @ p['fc2_w'] + p['fc2_b']


# --------------------------------- parameters ----------------------------------
def init_params(key, dim, num_heads, mlp_ratio=4.0):
    pos_dim = (dim // 4) // 4
    hidden = int(dim * mlp_ratio)
    ks = jax.random.split(key, 16)

    def w(k, shape, s=0.02):
        return jax.random.normal(k, shape, jnp.float32) * s

    return {
        'norm1_g': jnp.ones((dim,), jnp.float32),
        'norm1_b': jnp.zeros((dim,), jnp.float32),
        'qkv_w': w(ks[0], (dim, 3 * dim)),
        'qkv_b': w(ks[1], (3 * dim,)),
        'proj_w': w(ks[2], (dim, dim)),
        'proj_b': w(ks[3], (dim,)),
        'pos_proj_w': w(ks[4], (2, pos_dim)),
        'pos_proj_b': w(ks[5], (1, pos_dim)),
        'pos1_ln_g': jnp.ones((1, pos_dim), jnp.float32),
        'pos1_ln_b': jnp.zeros((1, pos_dim), jnp.float32),
        'pos1_w': w(ks[6], (pos_dim, pos_dim)),
        'pos1_b': w(ks[7], (1, pos_dim)),
        'pos2_ln_g': jnp.ones((1, pos_dim), jnp.float32),
        'pos2_ln_b': jnp.zeros((1, pos_dim), jnp.float32),
        'pos2_w': w(ks[8], (pos_dim, pos_dim)),
        'pos2_b': w(ks[9], (1, pos_dim)),
        'pos3_ln_g': jnp.ones((1, pos_dim), jnp.float32),
        'pos3_ln_b': jnp.zeros((1, pos_dim), jnp.float32),
        'pos3_w': w(ks[10], (pos_dim, num_heads)),
        'pos3_b': w(ks[11], (1, num_heads)),
        'norm2_g': jnp.ones((dim,), jnp.float32),
        'norm2_b': jnp.zeros((dim,), jnp.float32),
        'fc1_w': w(ks[12], (dim, hidden)),
        'fc1_b': w(ks[13], (hidden,)),
        'fc2_w': w(ks[14], (hidden, dim)),
        'fc2_b': w(ks[15], (dim,)),
    }


if __name__ == "__main__":
    key = jax.random.PRNGKey(0)
    configs = [
        # (B, H, W, C, heads, group_size, interval, lsda_flag)
        (2, 8, 8, 32, 2, 4, 2, 0),   # SDA, no padding (mask path skipped)
        (2, 8, 8, 32, 2, 4, 2, 1),   # LDA, no padding
        (3, 6, 6, 32, 2, 4, 4, 0),   # SDA with padding (mask path)
        (2, 7, 7, 32, 2, 4, 2, 1),   # LDA with padding (mask path)
        (2, 4, 8, 32, 2, 4, 2, 1),   # forced SDA (min(H, W) <= group_size)
    ]
    for idx, (B, H, W, C, nh, gs, iv, flag) in enumerate(configs):
        kx, kp, key = jax.random.split(key, 3)
        x = jax.random.normal(kx, (B, H * W, C), jnp.float32)
        params = init_params(kp, C, nh)
        out = crossformer_block(x, H, W, params, num_heads=nh, group_size=gs,
                                interval=iv, lsda_flag=flag)
        out = jax.block_until_ready(out)
        assert out.shape == (B, H * W, C)
        assert bool(jnp.all(jnp.isfinite(out))), f"config {idx}: non-finite output"
        ref = crossformer_block_ref(x, H, W, params, num_heads=nh, group_size=gs,
                                    interval=iv, lsda_flag=flag)
        err = float(jnp.max(jnp.abs(out - ref)))
        # bf16 matmuls + approx reciprocal -> ~1e-2-level deviation from f32 ref
        assert err < 3e-2, f"config {idx}: max abs err {err}"
    print("KERNEL_OK")
</pallas_src>

<mosaic_0001>
module attributes {stable_mosaic.version = 11 : i64} {
  func.func @_attn_kernel_sda(%arg0: i32, %arg1: i32, %arg2: i32, %arg3: memref<1x4x8x32xf32, #tpu.memory_space<vmem>>, %arg4: memref<1x32xf32, #tpu.memory_space<vmem>>, %arg5: memref<1x32xf32, #tpu.memory_space<vmem>>, %arg6: memref<32x96xbf16, #tpu.memory_space<vmem>>, %arg7: memref<1x96xf32, #tpu.memory_space<vmem>>, %arg8: memref<32x32xbf16, #tpu.memory_space<vmem>>, %arg9: memref<1x32xf32, #tpu.memory_space<vmem>>, %arg10: memref<2x16x16xf32, #tpu.memory_space<vmem>>, %arg11: memref<1x4x8x32xf32, #tpu.memory_space<vmem>>) attributes {dimension_semantics = [#tpu.dimension_semantics<parallel>, #tpu.dimension_semantics<parallel>, #tpu.dimension_semantics<parallel>], iteration_bounds = array<i64: 2, 2, 1>, scalar_prefetch = 0 : i64, scratch_operands = 0 : i64, tpu.core_type = #tpu.core_type<tc>, window_params = [{transform_indices = @transform_0, window_bounds = array<i64: 1, 4, 8, 32>}, {pipeline_mode = #tpu.pipeline_mode<synchronous>, transform_indices = @transform_1, window_bounds = array<i64: 1, 32>}, {pipeline_mode = #tpu.pipeline_mode<synchronous>, transform_indices = @transform_2, window_bounds = array<i64: 1, 32>}, {pipeline_mode = #tpu.pipeline_mode<synchronous>, transform_indices = @transform_3, window_bounds = array<i64: 32, 96>}, {pipeline_mode = #tpu.pipeline_mode<synchronous>, transform_indices = @transform_4, window_bounds = array<i64: 1, 96>}, {pipeline_mode = #tpu.pipeline_mode<synchronous>, transform_indices = @transform_5, window_bounds = array<i64: 32, 32>}, {pipeline_mode = #tpu.pipeline_mode<synchronous>, transform_indices = @transform_6, window_bounds = array<i64: 1, 32>}, {pipeline_mode = #tpu.pipeline_mode<synchronous>, transform_indices = @transform_7, window_bounds = array<i64: 2, 16, 16>}, {transform_indices = @transform_8, window_bounds = array<i64: 1, 4, 8, 32>}]} {
    %c0 = arith.constant 0 : index
    %c0_0 = arith.constant 0 : index
    %c0_1 = arith.constant 0 : index
    %c0_2 = arith.constant 0 : index
    %0 = vector.load %arg3[%c0, %c0_0, %c0_1, %c0_2] : memref<1x4x8x32xf32, #tpu.memory_space<vmem>>, vector<1x4x8x32xf32>
    %1 = vector.shape_cast %0 : vector<1x4x8x32xf32> to vector<4x2x4x32xf32>
    %2 = tpu.transpose %1, [1, 0, 2, 3] : vector<4x2x4x32xf32> -> vector<2x4x4x32xf32>
    %3 = vector.shape_cast %2 : vector<2x4x4x32xf32> to vector<2x16x32xf32>
    %c0_3 = arith.constant 0 : index
    %c0_4 = arith.constant 0 : index
    %4 = vector.load %arg4[%c0_3, %c0_4] : memref<1x32xf32, #tpu.memory_space<vmem>>, vector<1x32xf32>
    %5 = vector.shape_cast %4 : vector<1x32xf32> to vector<32xf32>
    %c0_5 = arith.constant 0 : index
    %c0_6 = arith.constant 0 : index
    %6 = vector.load %arg5[%c0_5, %c0_6] : memref<1x32xf32, #tpu.memory_space<vmem>>, vector<1x32xf32>
    %7 = vector.shape_cast %6 : vector<1x32xf32> to vector<32xf32>
    %c0_7 = arith.constant 0 : index
    %c0_8 = arith.constant 0 : index
    %8 = vector.load %arg6[%c0_7, %c0_8] : memref<32x96xbf16, #tpu.memory_space<vmem>>, vector<32x96xbf16>
    %c0_9 = arith.constant 0 : index
    %c0_10 = arith.constant 0 : index
    %9 = vector.load %arg7[%c0_9, %c0_10] : memref<1x96xf32, #tpu.memory_space<vmem>>, vector<1x96xf32>
    %10 = vector.shape_cast %9 : vector<1x96xf32> to vector<96xf32>
    %c0_11 = arith.constant 0 : index
    %c0_12 = arith.constant 0 : index
    %11 = vector.load %arg8[%c0_11, %c0_12] : memref<32x32xbf16, #tpu.memory_space<vmem>>, vector<32x32xbf16>
    %c0_13 = arith.constant 0 : index
    %c0_14 = arith.constant 0 : index
    %12 = vector.load %arg9[%c0_13, %c0_14] : memref<1x32xf32, #tpu.memory_space<vmem>>, vector<1x32xf32>
    %13 = vector.shape_cast %12 : vector<1x32xf32> to vector<32xf32>
    %c0_15 = arith.constant 0 : index
    %c0_16 = arith.constant 0 : index
    %c0_17 = arith.constant 0 : index
    %14 = vector.load %arg10[%c0_15, %c0_16, %c0_17] : memref<2x16x16xf32, #tpu.memory_space<vmem>>, vector<2x16x16xf32>
    %15 = vector.shape_cast %3 : vector<2x16x32xf32> to vector<32x32xf32>
    %cst = arith.constant dense<0.000000e+00> : vector<32xf32>
    %16 = vector.multi_reduction <add>, %15, %cst [1] : vector<32x32xf32> to vector<32xf32>
    %17 = vector.shape_cast %16 : vector<32xf32> to vector<32x1xf32>
    %cst_18 = arith.constant 3.200000e+01 : f32
    %18 = vector.broadcast %cst_18 : f32 to vector<32x1xf32>
    %19 = arith.divf %17, %18 : vector<32x1xf32>
    %20 = vector.broadcast %19 : vector<32x1xf32> to vector<32x32xf32>
    %21 = arith.subf %15, %20 : vector<32x32xf32>
    %22 = vector.broadcast %19 : vector<32x1xf32> to vector<32x32xf32>
    %23 = arith.subf %15, %22 : vector<32x32xf32>
    %24 = arith.mulf %21, %23 : vector<32x32xf32>
    %cst_19 = arith.constant dense<0.000000e+00> : vector<32xf32>
    %25 = vector.multi_reduction <add>, %24, %cst_19 [1] : vector<32x32xf32> to vector<32xf32>
    %26 = vector.shape_cast %25 : vector<32xf32> to vector<32x1xf32>
    %cst_20 = arith.constant 3.200000e+01 : f32
    %27 = vector.broadcast %cst_20 : f32 to vector<32x1xf32>
    %28 = arith.divf %26, %27 : vector<32x1xf32>
    %29 = vector.broadcast %19 : vector<32x1xf32> to vector<32x32xf32>
    %30 = arith.subf %15, %29 : vector<32x32xf32>
    %cst_21 = arith.constant 9.99999974E-6 : f32
    %31 = vector.broadcast %cst_21 : f32 to vector<32x1xf32>
    %32 = arith.addf %28, %31 : vector<32x1xf32>
    %33 = math.rsqrt %32 : vector<32x1xf32>
    %34 = vector.broadcast %33 : vector<32x1xf32> to vector<32x32xf32>
    %35 = arith.mulf %30, %34 : vector<32x32xf32>
    %36 = vector.shape_cast %5 : vector<32xf32> to vector<1x32xf32>
    %37 = vector.broadcast %36 : vector<1x32xf32> to vector<32x32xf32>
    %38 = arith.mulf %35, %37 : vector<32x32xf32>
    %39 = vector.shape_cast %7 : vector<32xf32> to vector<1x32xf32>
    %40 = vector.broadcast %39 : vector<1x32xf32> to vector<32x32xf32>
    %41 = arith.addf %38, %40 : vector<32x32xf32>
    %42 = arith.truncf %41 : vector<32x32xf32> to vector<32x32xbf16>
    %cst_22 = arith.constant dense<0.000000e+00> : vector<32x96xf32>
    %43 = tpu.matmul %42, %8, %cst_22 {dimension_numbers = #tpu.dot_dimension_numbers<[1], [0], [0], [1], [0, 0, 1, 1], [], []>} : vector<32x32xbf16>, vector<32x96xbf16>, vector<32x96xf32> -> vector<32x96xf32>
    %44 = vector.shape_cast %10 : vector<96xf32> to vector<1x96xf32>
    %45 = vector.broadcast %44 : vector<1x96xf32> to vector<32x96xf32>
    %46 = arith.addf %43, %45 : vector<32x96xf32>
    %47 = arith.truncf %46 : vector<32x96xf32> to vector<32x96xbf16>
    %48 = vector.extract_strided_slice %47 {offsets = [0, 0], sizes = [32, 16], strides = [1, 1]} : vector<32x96xbf16> to vector<32x16xbf16>
    %49 = vector.shape_cast %48 : vector<32x16xbf16> to vector<2x16x16xbf16>
    %50 = vector.extract_strided_slice %47 {offsets = [0, 32], sizes = [32, 16], strides = [1, 1]} : vector<32x96xbf16> to vector<32x16xbf16>
    %51 = vector.shape_cast %50 : vector<32x16xbf16> to vector<2x16x16xbf16>
    %52 = vector.extract_strided_slice %47 {offsets = [0, 64], sizes = [32, 16], strides = [1, 1]} : vector<32x96xbf16> to vector<32x16xbf16>
    %53 = vector.shape_cast %52 : vector<32x16xbf16> to vector<2x16x16xbf16>
    "tpu.trace_start"() <{level = 10 : i32, message = "wqd,wkd->wqk"}> : () -> ()
    %cst_23 = arith.constant dense<0.000000e+00> : vector<2x16x16xf32>
    %54 = tpu.matmul %49, %51, %cst_23 {dimension_numbers = #tpu.dot_dimension_numbers<[2], [2], [1], [1], [0, 0, 0, 1, 1, 1], [0], [0]>} : vector<2x16x16xbf16>, vector<2x16x16xbf16>, vector<2x16x16xf32> -> vector<2x16x16xf32>
    "tpu.trace_stop"() : () -> ()
    %55 = vector.extract_strided_slice %14 {offsets = [0, 0, 0], sizes = [1, 16, 16], strides = [1, 1, 1]} : vector<2x16x16xf32> to vector<1x16x16xf32>
    %56 = vector.shape_cast %55 : vector<1x16x16xf32> to vector<16x16xf32>
    %57 = vector.shape_cast %56 : vector<16x16xf32> to vector<1x16x16xf32>
    %58 = vector.broadcast %57 : vector<1x16x16xf32> to vector<2x16x16xf32>
    %59 = arith.addf %54, %58 : vector<2x16x16xf32>
    %cst_24 = arith.constant dense<0xFF800000> : vector<2x16xf32>
    %60 = vector.multi_reduction <maximumf>, %59, %cst_24 [2] : vector<2x16x16xf32> to vector<2x16xf32>
    %61 = vector.shape_cast %60 : vector<2x16xf32> to vector<2x16x1xf32>
    %62 = vector.broadcast %61 : vector<2x16x1xf32> to vector<2x16x16xf32>
    %63 = arith.subf %59, %62 : vector<2x16x16xf32>
    %64 = math.exp %63 : vector<2x16x16xf32>
    %cst_25 = arith.constant dense<0.000000e+00> : vector<2x16xf32>
    %65 = vector.multi_reduction <add>, %64, %cst_25 [2] : vector<2x16x16xf32> to vector<2x16xf32>
    %66 = vector.shape_cast %65 : vector<2x16xf32> to vector<2x16x1xf32>
    %67 = tpu.reciprocal %66 {approx = true} : vector<2x16x1xf32> -> vector<2x16x1xf32>
    %68 = vector.broadcast %67 : vector<2x16x1xf32> to vector<2x16x16xf32>
    %69 = arith.mulf %64, %68 : vector<2x16x16xf32>
    %70 = arith.truncf %69 : vector<2x16x16xf32> to vector<2x16x16xbf16>
    "tpu.trace_start"() <{level = 10 : i32, message = "wqk,wkd->wqd"}> : () -> ()
    %cst_26 = arith.constant dense<0.000000e+00> : vector<2x16x16xf32>
    %71 = tpu.matmul %70, %53, %cst_26 {dimension_numbers = #tpu.dot_dimension_numbers<[2], [1], [1], [2], [0, 0, 0, 1, 1, 2], [0], [0]>} : vector<2x16x16xbf16>, vector<2x16x16xbf16>, vector<2x16x16xf32> -> vector<2x16x16xf32>
    "tpu.trace_stop"() : () -> ()
    %72 = vector.extract_strided_slice %47 {offsets = [0, 16], sizes = [32, 16], strides = [1, 1]} : vector<32x96xbf16> to vector<32x16xbf16>
    %73 = vector.shape_cast %72 : vector<32x16xbf16> to vector<2x16x16xbf16>
    %74 = vector.extract_strided_slice %47 {offsets = [0, 48], sizes = [32, 16], strides = [1, 1]} : vector<32x96xbf16> to vector<32x16xbf16>
    %75 = vector.shape_cast %74 : vector<32x16xbf16> to vector<2x16x16xbf16>
    %76 = vector.extract_strided_slice %47 {offsets = [0, 80], sizes = [32, 16], strides = [1, 1]} : vector<32x96xbf16> to vector<32x16xbf16>
    %77 = vector.shape_cast %76 : vector<32x16xbf16> to vector<2x16x16xbf16>
    "tpu.trace_start"() <{level = 10 : i32, message = "wqd,wkd->wqk"}> : () -> ()
    %cst_27 = arith.constant dense<0.000000e+00> : vector<2x16x16xf32>
    %78 = tpu.matmul %73, %75, %cst_27 {dimension_numbers = #tpu.dot_dimension_numbers<[2], [2], [1], [1], [0, 0, 0, 1, 1, 1], [0], [0]>} : vector<2x16x16xbf16>, vector<2x16x16xbf16>, vector<2x16x16xf32> -> vector<2x16x16xf32>
    "tpu.trace_stop"() : () -> ()
    %79 = vector.extract_strided_slice %14 {offsets = [1, 0, 0], sizes = [1, 16, 16], strides = [1, 1, 1]} : vector<2x16x16xf32> to vector<1x16x16xf32>
    %80 = vector.shape_cast %79 : vector<1x16x16xf32> to vector<16x16xf32>
    %81 = vector.shape_cast %80 : vector<16x16xf32> to vector<1x16x16xf32>
    %82 = vector.broadcast %81 : vector<1x16x16xf32> to vector<2x16x16xf32>
    %83 = arith.addf %78, %82 : vector<2x16x16xf32>
    %cst_28 = arith.constant dense<0xFF800000> : vector<2x16xf32>
    %84 = vector.multi_reduction <maximumf>, %83, %cst_28 [2] : vector<2x16x16xf32> to vector<2x16xf32>
    %85 = vector.shape_cast %84 : vector<2x16xf32> to vector<2x16x1xf32>
    %86 = vector.broadcast %85 : vector<2x16x1xf32> to vector<2x16x16xf32>
    %87 = arith.subf %83, %86 : vector<2x16x16xf32>
    %88 = math.exp %87 : vector<2x16x16xf32>
    %cst_29 = arith.constant dense<0.000000e+00> : vector<2x16xf32>
    %89 = vector.multi_reduction <add>, %88, %cst_29 [2] : vector<2x16x16xf32> to vector<2x16xf32>
    %90 = vector.shape_cast %89 : vector<2x16xf32> to vector<2x16x1xf32>
    %91 = tpu.reciprocal %90 {approx = true} : vector<2x16x1xf32> -> vector<2x16x1xf32>
    %92 = vector.broadcast %91 : vector<2x16x1xf32> to vector<2x16x16xf32>
    %93 = arith.mulf %88, %92 : vector<2x16x16xf32>
    %94 = arith.truncf %93 : vector<2x16x16xf32> to vector<2x16x16xbf16>
    "tpu.trace_start"() <{level = 10 : i32, message = "wqk,wkd->wqd"}> : () -> ()
    %cst_30 = arith.constant dense<0.000000e+00> : vector<2x16x16xf32>
    %95 = tpu.matmul %94, %77, %cst_30 {dimension_numbers = #tpu.dot_dimension_numbers<[2], [1], [1], [2], [0, 0, 0, 1, 1, 2], [0], [0]>} : vector<2x16x16xbf16>, vector<2x16x16xbf16>, vector<2x16x16xf32> -> vector<2x16x16xf32>
    "tpu.trace_stop"() : () -> ()
    %96 = tpu.concatenate %71, %95 in 2 : vector<2x16x16xf32>, vector<2x16x16xf32> -> vector<2x16x32xf32>
    %97 = vector.shape_cast %96 : vector<2x16x32xf32> to vector<32x32xf32>
    %98 = arith.truncf %97 : vector<32x32xf32> to vector<32x32xbf16>
    %cst_31 = arith.constant dense<0.000000e+00> : vector<32x32xf32>
    %99 = tpu.matmul %98, %11, %cst_31 {dimension_numbers = #tpu.dot_dimension_numbers<[1], [0], [0], [1], [0, 0, 1, 1], [], []>} : vector<32x32xbf16>, vector<32x32xbf16>, vector<32x32xf32> -> vector<32x32xf32>
    %100 = vector.shape_cast %13 : vector<32xf32> to vector<1x32xf32>
    %101 = vector.broadcast %100 : vector<1x32xf32> to vector<32x32xf32>
    %102 = arith.addf %99, %101 : vector<32x32xf32>
    %103 = vector.shape_cast %102 : vector<32x32xf32> to vector<2x16x32xf32>
    %104 = vector.shape_cast %103 : vector<2x16x32xf32> to vector<2x4x4x32xf32>
    %105 = tpu.transpose %104, [1, 0, 2, 3] : vector<2x4x4x32xf32> -> vector<4x2x4x32xf32>
    %106 = vector.shape_cast %105 : vector<4x2x4x32xf32> to vector<1x4x8x32xf32>
    %c0_32 = arith.constant 0 : index
    %c0_33 = arith.constant 0 : index
    %c0_34 = arith.constant 0 : index
    %c0_35 = arith.constant 0 : index
    %107 = vector.load %arg11[%c0_32, %c0_33, %c0_34, %c0_35] : memref<1x4x8x32xf32, #tpu.memory_space<vmem>>, vector<1x4x8x32xf32>
    tpu.vector_store %arg11[%c0_32, %c0_33, %c0_34, %c0_35], %106 {strides = array<i32>} : memref<1x4x8x32xf32, #tpu.memory_space<vmem>>, vector<1x4x8x32xf32>,
    return
  }
  func.func @transform_0(%arg0: i32, %arg1: i32, %arg2: i32) -> (i32, i32, i32, i32) {
    %c0_i32 = arith.constant 0 : i32
    %c0_i32_0 = arith.constant 0 : i32
    return %arg0, %arg1, %arg2, %c0_i32 : i32, i32, i32, i32
  }
  func.func @transform_1(%arg0: i32, %arg1: i32, %arg2: i32) -> (i32, i32) {
    %c0_i32 = arith.constant 0 : i32
    %c0_i32_0 = arith.constant 0 : i32
    %c0_i32_1 = arith.constant 0 : i32
    return %c0_i32, %c0_i32_0 : i32, i32
  }
  func.func @transform_2(%arg0: i32, %arg1: i32, %arg2: i32) -> (i32, i32) {
    %c0_i32 = arith.constant 0 : i32
    %c0_i32_0 = arith.constant 0 : i32
    %c0_i32_1 = arith.constant 0 : i32
    return %c0_i32, %c0_i32_0 : i32, i32
  }
  func.func @transform_3(%arg0: i32, %arg1: i32, %arg2: i32) -> (i32, i32) {
    %c0_i32 = arith.constant 0 : i32
    %c0_i32_0 = arith.constant 0 : i32
    %c0_i32_1 = arith.constant 0 : i32
    return %c0_i32, %c0_i32_0 : i32, i32
  }
  func.func @transform_4(%arg0: i32, %arg1: i32, %arg2: i32) -> (i32, i32) {
    %c0_i32 = arith.constant 0 : i32
    %c0_i32_0 = arith.constant 0 : i32
    %c0_i32_1 = arith.constant 0 : i32
    return %c0_i32, %c0_i32_0 : i32, i32
  }
  func.func @transform_5(%arg0: i32, %arg1: i32, %arg2: i32) -> (i32, i32) {
    %c0_i32 = arith.constant 0 : i32
    %c0_i32_0 = arith.constant 0 : i32
    %c0_i32_1 = arith.constant 0 : i32
    return %c0_i32, %c0_i32_0 : i32, i32
  }
  func.func @transform_6(%arg0: i32, %arg1: i32, %arg2: i32) -> (i32, i32) {
    %c0_i32 = arith.constant 0 : i32
    %c0_i32_0 = arith.constant 0 : i32
    %c0_i32_1 = arith.constant 0 : i32
    return %c0_i32, %c0_i32_0 : i32, i32
  }
  func.func @transform_7(%arg0: i32, %arg1: i32, %arg2: i32) -> (i32, i32, i32) {
    %c0_i32 = arith.constant 0 : i32
    %c0_i32_0 = arith.constant 0 : i32
    %c0_i32_1 = arith.constant 0 : i32
    %c0_i32_2 = arith.constant 0 : i32
    return %c0_i32, %c0_i32_0, %c0_i32_1 : i32, i32, i32
  }
  func.func @transform_8(%arg0: i32, %arg1: i32, %arg2: i32) -> (i32, i32, i32, i32) {
    %c0_i32 = arith.constant 0 : i32
    %c0_i32_0 = arith.constant 0 : i32
    return %arg0, %arg1, %arg2, %c0_i32 : i32, i32, i32, i32
  }
}

</mosaic_0001>

<llo_original>
// kernel: tpu_custom_call.1
$region0: #{tpu_custom_call.1}
  #allocation0 [shape = 'u32[]', space=smem, size = 0x4, offset = 0x4, fixed_abs, tag = 'smem constant byte address 0x4 - core index']
  #allocation1 [shape = 'u32[144,128]{1,0:T(1,128)}', space=vmem, size = 0x12000, scoped, tag = 'internal scratch']
  %s0 = inlined_call_operand.hbm [shape: f32[2,8,8,32], index: 0, kind: input, shape index: {}]
  %s1 = inlined_call_operand.vmem [shape: f32[1,32], index: 1, kind: input, shape index: {}]
  %s2 = inlined_call_operand.vmem [shape: f32[1,32], index: 2, kind: input, shape index: {}]
  %s3 = inlined_call_operand.hbm [shape: bf16[32,96], index: 3, kind: input, shape index: {}]
  %s4 = inlined_call_operand.hbm [shape: f32[1,96], index: 4, kind: input, shape index: {}]
  %s5 = inlined_call_operand.vmem [shape: bf16[32,32], index: 5, kind: input, shape index: {}]
  %s6 = inlined_call_operand.vmem [shape: f32[1,32], index: 6, kind: input, shape index: {}]
  %s7 = inlined_call_operand.hbm [shape: f32[2,16,16], index: 7, kind: input, shape index: {}]
  %s8 = inlined_call_operand.hbm [shape: f32[2,8,8,32], index: 8, kind: output, shape index: {}]
  %s9 = sld [smem:[#allocation0]]
  $region81: #{tpu_custom_call.1} parent=0
    _
  %s11 = ssub.s32 1, %s9
  %s12 = scalar_select 0, %s11, %s9
  $region1: #{tpu_custom_call.1} parent=0
    #allocation2 [shape = 'u8[32768]{0}', space=vmem, size = 0x8000, scoped, tag = 'input window, operand 0']
    #allocation3 [shape = 's32[2]{0}', space=sflag, size = 0x8, scoped, tag = 'scoped memory for tpu_custom_call.1']
    #allocation4 [shape = 's32[2]{0}', space=sflag, size = 0x8, scoped, tag = 'scoped memory for tpu_custom_call.1']
    #allocation5 [shape = 'u8[8192]{0}', space=vmem, size = 0x2000, scoped, tag = 'input window, operand 3, single buffered']
    #allocation6 [shape = 's32[1]{0}', space=sflag, size = 0x4, scoped, tag = 'scoped memory for tpu_custom_call.1']
    #allocation7 [shape = 'u8[512]{0}', space=vmem, size = 0x400, scoped, tag = 'input window, operand 4, single buffered']
    #allocation8 [shape = 'u8[16384]{0}', space=vmem, size = 0x4000, scoped, tag = 'input window, operand 7, single buffered']
    #allocation9 [shape = 's32[1]{0}', space=sflag, size = 0x4, scoped, tag = 'scoped memory for tpu_custom_call.1']
    #allocation10 [shape = 'u8[32768]{0}', space=vmem, size = 0x8000, scoped, tag = 'output window, operand 0']
    %13 = vsyncpa [#allocation3], 0
    %s14 = scalar_lea.sflag [#allocation3], 1
    %15 = vsyncpa %s14, 0
    %16 = vsyncpa [#allocation6], 0
    %17 = vsyncpa [#allocation9], 0
    %18 = vsyncpa [#allocation4], 0
    %s19 = scalar_lea.sflag [#allocation4], 1
    %20 = vsyncpa %s19, 0
    loop: start=0, step=1, limit=6
    $region2: #{tpu_custom_call.1} parent=1 // loop_pre_header
      _
    $region3: #{tpu_custom_call.1} parent=1 // loop_header
      %s22 = sphi 0, %s26
      %p23 = scmp.ge.s32.totalorder %s22, 6
      %s29 = sphi 0, %s48
      %s30 = sphi 0, %s44
      %s31 = sphi 0, %s40
      %s32 = sphi 0, %s29
      %s33 = sphi 0, %s30
      %s34 = sphi 0, %s31
      %s35 = sphi 0, %s32
      %s36 = sphi 0, %s33
      %s37 = sphi 0, %s34
      %s55 = sphi 0, %s57
      %s58 = sphi 0, %s55
      %s59 = sphi 0, %s58
      %s75 = sphi 0, %s59
      %s79 = sphi 0, %s79
      %s81 = sphi 0, %s79
      %s82 = sphi 0, %s81
      %s96 = sphi 0, %s82
      %s100 = sphi 0, %s100
      %s102 = sphi 0, %s100
      %s103 = sphi 0, %s102
      %s117 = sphi 0, %s103
      %s121 = sphi 0, %s121
      %s123 = sphi 0, %s121
      %s124 = sphi 0, %s123
      %s138 = sphi 0, %s124
      %s142 = sphi 0, %s142
      %s144 = sphi 0, %s142
      %s145 = sphi 0, %s144
      %s159 = sphi 0, %s145
      %s163 = sphi 0, %s163
      %s165 = sphi 0, %s163
      %s166 = sphi 0, %s165
      %s180 = sphi 0, %s166
      %s184 = sphi 0, %s184
      %s186 = sphi 0, %s184
      %s187 = sphi 0, %s186
      %s201 = sphi 0, %s187
      %s205 = sphi 0, %s205
      %s207 = sphi 0, %s205
      %s208 = sphi 0, %s207
      %s222 = sphi 0, %s208
      %s232 = sphi 0, %s234
      %s235 = sphi 0, %s232
      %s236 = sphi 0, %s235
      %s252 = sphi 0, %s236
    $region4: #{tpu_custom_call.1} parent=1 // loop_header_branch
      %25 = sbr.rel (%p23) target = $region8
    $region5: #{tpu_custom_call.1} parent=1 // loop_body
      %s27 = ssub.s32 %s22, 1
      %s28 = ssub.s32 %s22, 2
      %s38 = sadd.s32 1, %s31
      %p39 = scmp.ge.s32.totalorder %s38, 1
      %s40 = scalar_select %p39, 0, %s38
      %s41 = sadd.s32 1, %s30
      %s42 = scalar_select %p39, %s41, %s30
      %p43 = scmp.ge.s32.totalorder %s42, 2
      %s44 = scalar_select %p43, 0, %s42
      %s45 = sadd.s32 1, %s29
      %s46 = scalar_select %p43, %s45, %s29
      %p47 = scmp.ge.s32.totalorder %s46, 2
      %s48 = scalar_select %p47, 0, %s46
      %s49 = ssub.s32 %s29, %s48
      %s50 = ssub.s32 %s30, %s44
      %s51 = sor.u32 %s49, %s50
      %s52 = ssub.s32 %s31, %s40
      %s53 = sor.u32 %s51, %s52
      %p54 = scmp.eq.s32.totalorder %s53, 0
      %s56 = sadd.s32 %s55, 1
      %s57 = scalar_select %p54, %s55, %s56
      %p60 = pneg %p54
      %p61 = scmp.eq.s32.totalorder %s22, 3
      %p62 = por %p60, %p61
      %p63 = scmp.ne.s32.totalorder %s55, %s58
      %p64 = scmp.eq.s32.totalorder %s22, 0
      %p65 = por %p63, %p64
      %p66 = scmp.ne.s32.totalorder %s55, %s58
      %p67 = scmp.eq.s32.totalorder %s27, 3
      %p68 = por %p66, %p67
      %p69 = scmp.ne.s32.totalorder %s58, %s59
      %p70 = scmp.eq.s32.totalorder %s27, 0
      %p71 = por %p69, %p70
      %p72 = scmp.ne.s32.totalorder %s58, %s59
      %p73 = scmp.eq.s32.totalorder %s28, 3
      %p74 = por %p72, %p73
      %p76 = scmp.ne.s32.totalorder %s59, %s75
      %p77 = scmp.eq.s32.totalorder %s28, 0
      %p78 = por %p76, %p77
      %s80 = sadd.s32 %s79, 1
      %p83 = scmp.eq.s32.totalorder %s22, 3
      %p84 = scmp.ne.s32.totalorder %s79, %s81
      %p85 = scmp.eq.s32.totalorder %s22, 0
      %p86 = por %p84, %p85
      %p87 = scmp.ne.s32.totalorder %s79, %s81
      %p88 = scmp.eq.s32.totalorder %s27, 3
      %p89 = por %p87, %p88
      %p90 = scmp.ne.s32.totalorder %s81, %s82
      %p91 = scmp.eq.s32.totalorder %s27, 0
      %p92 = por %p90, %p91
      %p93 = scmp.ne.s32.totalorder %s81, %s82
      %p94 = scmp.eq.s32.totalorder %s28, 3
      %p95 = por %p93, %p94
      %p97 = scmp.ne.s32.totalorder %s82, %s96
      %p98 = scmp.eq.s32.totalorder %s28, 0
      %p99 = por %p97, %p98
      %s101 = sadd.s32 %s100, 1
      %p104 = scmp.eq.s32.totalorder %s22, 3
      %p105 = scmp.ne.s32.totalorder %s100, %s102
      %p106 = scmp.eq.s32.totalorder %s22, 0
      %p107 = por %p105, %p106
      %p108 = scmp.ne.s32.totalorder %s100, %s102
      %p109 = scmp.eq.s32.totalorder %s27, 3
      %p110 = por %p108, %p109
      %p111 = scmp.ne.s32.totalorder %s102, %s103
      %p112 = scmp.eq.s32.totalorder %s27, 0
      %p113 = por %p111, %p112
      %p114 = scmp.ne.s32.totalorder %s102, %s103
      %p115 = scmp.eq.s32.totalorder %s28, 3
      %p116 = por %p114, %p115
      %p118 = scmp.ne.s32.totalorder %s103, %s117
      %p119 = scmp.eq.s32.totalorder %s28, 0
      %p120 = por %p118, %p119
      %s122 = sadd.s32 %s121, 1
      %p125 = scmp.eq.s32.totalorder %s22, 3
      %p126 = scmp.ne.s32.totalorder %s121, %s123
      %p127 = scmp.eq.s32.totalorder %s22, 0
      %p128 = por %p126, %p127
      %p129 = scmp.ne.s32.totalorder %s121, %s123
      %p130 = scmp.eq.s32.totalorder %s27, 3
      %p131 = por %p129, %p130
      %p132 = scmp.ne.s32.totalorder %s123, %s124
      %p133 = scmp.eq.s32.totalorder %s27, 0
      %p134 = por %p132, %p133
      %p135 = scmp.ne.s32.totalorder %s123, %s124
      %p136 = scmp.eq.s32.totalorder %s28, 3
      %p137 = por %p135, %p136
      %p139 = scmp.ne.s32.totalorder %s124, %s138
      %p140 = scmp.eq.s32.totalorder %s28, 0
      %p141 = por %p139, %p140
      %s143 = sadd.s32 %s142, 1
      %p146 = scmp.eq.s32.totalorder %s22, 3
      %p147 = scmp.ne.s32.totalorder %s142, %s144
      %p148 = scmp.eq.s32.totalorder %s22, 0
      %p149 = por %p147, %p148
      %p150 = scmp.ne.s32.totalorder %s142, %s144
      %p151 = scmp.eq.s32.totalorder %s27, 3
      %p152 = por %p150, %p151
      %p153 = scmp.ne.s32.totalorder %s144, %s145
      %p154 = scmp.eq.s32.totalorder %s27, 0
      %p155 = por %p153, %p154
      %p156 = scmp.ne.s32.totalorder %s144, %s145
      %p157 = scmp.eq.s32.totalorder %s28, 3
      %p158 = por %p156, %p157
      %p160 = scmp.ne.s32.totalorder %s145, %s159
      %p161 = scmp.eq.s32.totalorder %s28, 0
      %p162 = por %p160, %p161
      %s164 = sadd.s32 %s163, 1
      %p167 = scmp.eq.s32.totalorder %s22, 3
      %p168 = scmp.ne.s32.totalorder %s163, %s165
      %p169 = scmp.eq.s32.totalorder %s22, 0
      %p170 = por %p168, %p169
      %p171 = scmp.ne.s32.totalorder %s163, %s165
      %p172 = scmp.eq.s32.totalorder %s27, 3
      %p173 = por %p171, %p172
      %p174 = scmp.ne.s32.totalorder %s165, %s166
      %p175 = scmp.eq.s32.totalorder %s27, 0
      %p176 = por %p174, %p175
      %p177 = scmp.ne.s32.totalorder %s165, %s166
      %p178 = scmp.eq.s32.totalorder %s28, 3
      %p179 = por %p177, %p178
      %p181 = scmp.ne.s32.totalorder %s166, %s180
      %p182 = scmp.eq.s32.totalorder %s28, 0
      %p183 = por %p181, %p182
      %s185 = sadd.s32 %s184, 1
      %p188 = scmp.eq.s32.totalorder %s22, 3
      %p189 = scmp.ne.s32.totalorder %s184, %s186
      %p190 = scmp.eq.s32.totalorder %s22, 0
      %p191 = por %p189, %p190
      %p192 = scmp.ne.s32.totalorder %s184, %s186
      %p193 = scmp.eq.s32.totalorder %s27, 3
      %p194 = por %p192, %p193
      %p195 = scmp.ne.s32.totalorder %s186, %s187
      %p196 = scmp.eq.s32.totalorder %s27, 0
      %p197 = por %p195, %p196
      %p198 = scmp.ne.s32.totalorder %s186, %s187
      %p199 = scmp.eq.s32.totalorder %s28, 3
      %p200 = por %p198, %p199
      %p202 = scmp.ne.s32.totalorder %s187, %s201
      %p203 = scmp.eq.s32.totalorder %s28, 0
      %p204 = por %p202, %p203
      %s206 = sadd.s32 %s205, 1
      %p209 = scmp.eq.s32.totalorder %s22, 3
      %p210 = scmp.ne.s32.totalorder %s205, %s207
      %p211 = scmp.eq.s32.totalorder %s22, 0
      %p212 = por %p210, %p211
      %p213 = scmp.ne.s32.totalorder %s205, %s207
      %p214 = scmp.eq.s32.totalorder %s27, 3
      %p215 = por %p213, %p214
      %p216 = scmp.ne.s32.totalorder %s207, %s208
      %p217 = scmp.eq.s32.totalorder %s27, 0
      %p218 = por %p216, %p217
      %p219 = scmp.ne.s32.totalorder %s207, %s208
      %p220 = scmp.eq.s32.totalorder %s28, 3
      %p221 = por %p219, %p220
      %p223 = scmp.ne.s32.totalorder %s208, %s222
      %p224 = scmp.eq.s32.totalorder %s28, 0
      %p225 = por %p223, %p224
      %s226 = ssub.s32 %s29, %s48
      %s227 = ssub.s32 %s30, %s44
      %s228 = sor.u32 %s226, %s227
      %s229 = ssub.s32 %s31, %s40
      %s230 = sor.u32 %s228, %s229
      %p231 = scmp.eq.s32.totalorder %s230, 0
      %s233 = sadd.s32 %s232, 1
      %s234 = scalar_select %p231, %s232, %s233
      %p237 = pneg %p231
      %p238 = scmp.eq.s32.totalorder %s22, 3
      %p239 = por %p237, %p238
      %p240 = scmp.ne.s32.totalorder %s232, %s235
      %p241 = scmp.eq.s32.totalorder %s22, 0
      %p242 = por %p240, %p241
      %p243 = scmp.ne.s32.totalorder %s232, %s235
      %p244 = scmp.eq.s32.totalorder %s27, 3
      %p245 = por %p243, %p244
      %p246 = scmp.ne.s32.totalorder %s235, %s236
      %p247 = scmp.eq.s32.totalorder %s27, 0
      %p248 = por %p246, %p247
      %p249 = scmp.ne.s32.totalorder %s235, %s236
      %p250 = scmp.eq.s32.totalorder %s28, 3
      %p251 = por %p249, %p250
      %p253 = scmp.ne.s32.totalorder %s236, %s252
      %p254 = scmp.eq.s32.totalorder %s28, 0
      %p255 = por %p253, %p254
      %p256 = scmp.le.s32.totalorder 1, %s22
      %p257 = scmp.lt.s32.totalorder %s22, 5
      %p258 = pnand %p256, %p257
      %p259 = pneg %p258
      // Predicated region
      $region9: #{tpu_custom_call.1} parent=5 // pred_check
        _
      $region10: #{tpu_custom_call.1} parent=5 // pred_check_branch
        %261 = sbr.rel (%p258) target = $region12
      $region11: #{tpu_custom_call.1} parent=5 // pred_region
        %s262 = ssub.s32 %s22, 1
        // Predicated region
        $region13: #{tpu_custom_call.1} parent=11 // pred_check
          %p263 = pneg %p92
        $region14: #{tpu_custom_call.1} parent=11 // pred_check_branch
          %265 = sbr.rel (%p263) target = $region16
        $region15: #{tpu_custom_call.1} parent=11 // pred_region
          _
        $region16: #{tpu_custom_call.1} parent=11 // pred_fallthru
          _
        // Predicated region
        $region17: #{tpu_custom_call.1} parent=11 // pred_check
          %p266 = pneg %p113
        $region18: #{tpu_custom_call.1} parent=11 // pred_check_branch
          %268 = sbr.rel (%p266) target = $region20
        $region19: #{tpu_custom_call.1} parent=11 // pred_region
          _
        $region20: #{tpu_custom_call.1} parent=11 // pred_fallthru
          _
        // Predicated region
        $region21: #{tpu_custom_call.1} parent=11 // pred_check
          %p269 = pneg %p134
        $region22: #{tpu_custom_call.1} parent=11 // pred_check_branch
          %271 = sbr.rel (%p269) target = $region24
        $region23: #{tpu_custom_call.1} parent=11 // pred_region
          %s273 = ssub.s32 256, 256
          %274 = vsyncadd [#allocation6], %s273
          %s275 = sshll.u32 [#allocation5], 4
          %s276 = int_to_ptr.vmem [resolvable:$true] %s275
          %281 = dma.hbm_to_vmem [thread:$0]  %s3, 256, %s276, [#allocation6], 64, 64, 4
        $region24: #{tpu_custom_call.1} parent=11 // pred_fallthru
          _
        // Predicated region
        $region25: #{tpu_custom_call.1} parent=11 // pred_check
          %p282 = pneg %p155
        $region26: #{tpu_custom_call.1} parent=11 // pred_check_branch
          %284 = sbr.rel (%p282) target = $region28
        $region27: #{tpu_custom_call.1} parent=11 // pred_region
          %s286 = ssub.s32 16, 16
          %287 = vsyncadd [#allocation6], %s286
          %s289 = sshll.u32 [#allocation7], 4
          %s290 = int_to_ptr.vmem [resolvable:$true] %s289
          %292 = dma.hbm_to_vmem [thread:$0]  %s4, 16, %s290, [#allocation6]
        $region28: #{tpu_custom_call.1} parent=11 // pred_fallthru
          _
        // Predicated region
        $region29: #{tpu_custom_call.1} parent=11 // pred_check
          %p293 = pneg %p176
        $region30: #{tpu_custom_call.1} parent=11 // pred_check_branch
          %295 = sbr.rel (%p293) target = $region32
        $region31: #{tpu_custom_call.1} parent=11 // pred_region
          _
        $region32: #{tpu_custom_call.1} parent=11 // pred_fallthru
          _
        // Predicated region
        $region33: #{tpu_custom_call.1} parent=11 // pred_check
          %p296 = pneg %p197
        $region34: #{tpu_custom_call.1} parent=11 // pred_check_branch
          %298 = sbr.rel (%p296) target = $region36
        $region35: #{tpu_custom_call.1} parent=11 // pred_region
          _
        $region36: #{tpu_custom_call.1} parent=11 // pred_fallthru
          _
        // Predicated region
        $region37: #{tpu_custom_call.1} parent=11 // pred_check
          %p299 = pneg %p218
        $region38: #{tpu_custom_call.1} parent=11 // pred_check_branch
          %301 = sbr.rel (%p299) target = $region40
        $region39: #{tpu_custom_call.1} parent=11 // pred_region
          %s303 = ssub.s32 512, 512
          %304 = vsyncadd [#allocation9], %s303
          %s305 = sshll.u32 [#allocation8], 4
          %s306 = int_to_ptr.vmem [resolvable:$true] %s305
          %311 = dma.hbm_to_vmem [thread:$0]  %s7, 512, %s306, [#allocation9], 128, 128, 8
        $region40: #{tpu_custom_call.1} parent=11 // pred_fallthru
          _
      $region12: #{tpu_custom_call.1} parent=5 // pred_fallthru
        _
      %p312 = scmp.lt.s32.totalorder %s22, 4
      // Predicated region
      $region41: #{tpu_custom_call.1} parent=5 // pred_check
        %p313 = pneg %p312
      $region42: #{tpu_custom_call.1} parent=5 // pred_check_branch
        %315 = sbr.rel (%p313) target = $region44
      $region43: #{tpu_custom_call.1} parent=5 // pred_region
        // Predicated region
        $region45: #{tpu_custom_call.1} parent=43 // pred_check
          %p316 = pneg %p65
        $region46: #{tpu_custom_call.1} parent=43 // pred_check_branch
          %318 = sbr.rel (%p316) target = $region48
        $region47: #{tpu_custom_call.1} parent=43 // pred_region
          %s319 = sand.u32 %s55, 1
          %s320 = scalar_lea.sflag [#allocation3], %s319
          %s321 = sand.u32 %s55, 1
          %s322 = smul.addr %s321, 32
          %s323 = scalar_lea.vmem [#allocation2], %s322
          %s324 = smul.u32 4, %s30
          %s326 = ssub.s32 512, 512
          %327 = vsyncadd %s320, %s326
          %s328 = sadd.s32 %s31, %s324
          %s329 = smul.addr %s29, 8
          %s330 = sadd.s32 %s328, %s329
          %s331 = smul.addr %s330, 128
          %s332 = scalar_lea.hbm %s0, %s331
          %s333 = sshll.u32 %s323, 4
          %s334 = int_to_ptr.vmem [resolvable:$true] %s333
          %339 = dma.hbm_to_vmem [thread:$0]  %s332, 512, %s334, %s320, 128, 128, 8
        $region48: #{tpu_custom_call.1} parent=43 // pred_fallthru
          _
      $region44: #{tpu_custom_call.1} parent=5 // pred_fallthru
        _
      %p340 = scmp.le.s32.totalorder 1, %s22
      %p341 = scmp.lt.s32.totalorder %s22, 5
      %p342 = pnand %p340, %p341
      %p343 = pneg %p342
      // Predicated region
      $region49: #{tpu_custom_call.1} parent=5 // pred_check
        _
      $region50: #{tpu_custom_call.1} parent=5 // pred_check_branch
        %345 = sbr.rel (%p342) target = $region52
      $region51: #{tpu_custom_call.1} parent=5 // pred_region
        %s346 = ssub.s32 %s22, 1
        %s347 = sand.u32 %s58, 1
        %s348 = scalar_lea.sflag [#allocation3], %s347
        %s349 = sand.u32 %s58, 1
        %s350 = smul.addr %s349, 32
        %s351 = scalar_lea.vmem [#allocation2], %s350
        // Predicated region
        $region53: #{tpu_custom_call.1} parent=51 // pred_check
          %p352 = pneg %p71
        $region54: #{tpu_custom_call.1} parent=51 // pred_check_branch
          %354 = sbr.rel (%p352) target = $region56
        $region55: #{tpu_custom_call.1} parent=51 // pred_region
          %355 = dma.done %s348, 512
        $region56: #{tpu_custom_call.1} parent=51 // pred_fallthru
          _
        // Predicated region
        $region57: #{tpu_custom_call.1} parent=51 // pred_check
          %p356 = pneg %p134
        $region58: #{tpu_custom_call.1} parent=51 // pred_check_branch
          %358 = sbr.rel (%p356) target = $region60
        $region59: #{tpu_custom_call.1} parent=51 // pred_region
          %359 = dma.done [#allocation6], 256
        $region60: #{tpu_custom_call.1} parent=51 // pred_fallthru
          _
        // Predicated region
        $region61: #{tpu_custom_call.1} parent=51 // pred_check
          %p360 = pneg %p155
        $region62: #{tpu_custom_call.1} parent=51 // pred_check_branch
          %362 = sbr.rel (%p360) target = $region64
        $region63: #{tpu_custom_call.1} parent=51 // pred_region
          %363 = dma.done [#allocation6], 16
        $region64: #{tpu_custom_call.1} parent=51 // pred_fallthru
          _
        // Predicated region
        $region65: #{tpu_custom_call.1} parent=51 // pred_check
          %p364 = pneg %p218
        $region66: #{tpu_custom_call.1} parent=51 // pred_check_branch
          %366 = sbr.rel (%p364) target = $region68
        $region67: #{tpu_custom_call.1} parent=51 // pred_region
          %367 = dma.done [#allocation9], 512
        $region68: #{tpu_custom_call.1} parent=51 // pred_fallthru
          _
        %s368 = sand.u32 %s58, 1
        %s369 = scalar_lea.sflag [#allocation3], %s368
        %s370 = sand.u32 %s58, 1
        %s371 = smul.addr %s370, 32
        %s372 = scalar_lea.vmem [#allocation2], %s371
        %p373 = pneg %p71
        %p374 = pneg %p68
        %p375 = pneg %p92
        %p376 = pneg %p89
        %p377 = pneg %p113
        %p378 = pneg %p110
        %p379 = pneg %p134
        %p380 = pneg %p131
        %p381 = pneg %p155
        %p382 = pneg %p152
        %p383 = pneg %p176
        %p384 = pneg %p173
        %p385 = pneg %p197
        %p386 = pneg %p194
        %p387 = pneg %p218
        %p388 = pneg %p215
        %p389 = pneg %p248
        %p390 = pneg %p245
        %s391 = sand.u32 %s235, 1
        %s392 = scalar_lea.sflag [#allocation4], %s391
        %s393 = sand.u32 %s235, 1
        %s394 = smul.addr %s393, 32
        %s395 = scalar_lea.vmem [#allocation10], %s394
        %s396 = smul.u32 4, %s33
        %s397 = smul.u32 4, %s33
        %v399 = vld [vmem:[%s351] sm:$0xff]
        %v400 = vld [vmem:[%s351 + $0x8] sm:$0xff]
        %v401 = vld [vmem:[%s351 + $0x10] sm:$0xff]
        %v402 = vld [vmem:[%s351 + $0x18] sm:$0xff]
        %v407 = vcombine.high %v399, %v399
        %v408 = vcombine.high %v400, %v400
        %v409 = vcombine.high %v401, %v401
        %v410 = vcombine.high %v402, %v402
        %v415 = vld [vmem:[%s1] sm:$0x1]
        %v416 = vld [vmem:[%s2] sm:$0x1]
        %v417 = vld [vmem:[#allocation5] sm:$0xf]
        %v418 = vld [vmem:[#allocation5 + $0x4] sm:$0xf]
        %v419 = vld [vmem:[#allocation5 + $0x8] sm:$0xf]
        %v420 = vld [vmem:[#allocation5 + $0xc] sm:$0xf]
        %v421 = vld [vmem:[#allocation7] sm:$0x1]
        %v422 = vld [vmem:[%s5] sm:$0xf]
        %v423 = vld [vmem:[%s5 + $0x4] sm:$0xf]
        %v424 = vld [vmem:[%s5 + $0x8] sm:$0xf]
        %v425 = vld [vmem:[%s5 + $0xc] sm:$0xf]
        %v426 = vld [vmem:[%s6] sm:$0x1]
        %v427 = vld [vmem:[#allocation8] sm:$0xff]
        %v428 = vld [vmem:[#allocation8 + $0x8] sm:$0xff]
        %v429 = vld [vmem:[#allocation8 + $0x10] sm:$0xff]
        %v430 = vld [vmem:[#allocation8 + $0x18] sm:$0xff]
        %v431 = vcombine.low %v399, %v400
        %v432 = vcombine.low %v401, %v402
        %v433 = vcombine.low %v407, %v408
        %v434 = vcombine.low %v409, %v410
        %vm439 = vcmask 261120
        %v440 = vsel %vm439, %v431, 0.0
        %441 = vadd.xlane.f32.xlu0 %v440
        %v442 = vpop.xlane.xlu0 %441
        %v443 = vsel %vm439, %v432, 0.0
        %444 = vadd.xlane.f32.xlu0 %v443
        %v445 = vpop.xlane.xlu0 %444
        %v446 = vsel %vm439, %v433, 0.0
        %447 = vadd.xlane.f32.xlu0 %v446
        %v448 = vpop.xlane.xlu0 %447
        %v449 = vsel %vm439, %v434, 0.0
        %450 = vadd.xlane.f32.xlu0 %v449
        %v451 = vpop.xlane.xlu0 %450
        %v452 = vrcp.pop 32.0
        %v453 = vmul.f32 %v442, %v452
        %v454 = vmul.f32 %v445, %v452
        %v455 = vmul.f32 %v448, %v452
        %v456 = vmul.f32 %v451, %v452
        %v462 = vunpack.c.l.s4 839922192
        %v463 = vunpack.c.0.s8 %v462
        %v464 = vlaneseq
        %v465 = vshrl.u32 %v464, 7
        %v466 = vsub.s32 %v463, %v465
        %v467 = vrot.slane %v453, %v466
        %v469 = vunpack.c.l.s4 1985246804
        %v470 = vunpack.c.0.s8 %v469
        %v471 = vlaneseq
        %v472 = vshrl.u32 %v471, 7
        %v473 = vsub.s32 %v470, %v472
        %v474 = vrot.slane %v453, %v473
        %v476 = vunpack.c.l.s4 839922192
        %v477 = vunpack.c.0.s8 %v476
        %v478 = vlaneseq
        %v479 = vshrl.u32 %v478, 7
        %v480 = vsub.s32 %v477, %v479
        %v481 = vrot.slane %v454, %v480
        %v483 = vunpack.c.l.s4 1985246804
        %v484 = vunpack.c.0.s8 %v483
        %v485 = vlaneseq
        %v486 = vshrl.u32 %v485, 7
        %v487 = vsub.s32 %v484, %v486
        %v488 = vrot.slane %v454, %v487
        %v490 = vunpack.c.l.s4 839922192
        %v491 = vunpack.c.0.s8 %v490
        %v492 = vlaneseq
        %v493 = vshrl.u32 %v492, 7
        %v494 = vsub.s32 %v491, %v493
        %v495 = vrot.slane %v455, %v494
        %v497 = vunpack.c.l.s4 1985246804
        %v498 = vunpack.c.0.s8 %v497
        %v499 = vlaneseq
        %v500 = vshrl.u32 %v499, 7
        %v501 = vsub.s32 %v498, %v500
        %v502 = vrot.slane %v455, %v501
        %v504 = vunpack.c.l.s4 839922192
        %v505 = vunpack.c.0.s8 %v504
        %v506 = vlaneseq
        %v507 = vshrl.u32 %v506, 7
        %v508 = vsub.s32 %v505, %v507
        %v509 = vrot.slane %v456, %v508
        %v511 = vunpack.c.l.s4 1985246804
        %v512 = vunpack.c.0.s8 %v511
        %v513 = vlaneseq
        %v514 = vshrl.u32 %v513, 7
        %v515 = vsub.s32 %v512, %v514
        %v516 = vrot.slane %v456, %v515
        %v525 = vsub.f32 %v399, %v467
        %v526 = vsub.f32 %v400, %v474
        %v527 = vsub.f32 %v401, %v481
        %v528 = vsub.f32 %v402, %v488
        %v529 = vsub.f32 %v407, %v495
        %v530 = vsub.f32 %v408, %v502
        %v531 = vsub.f32 %v409, %v509
        %v532 = vsub.f32 %v410, %v516
        %v533 = vmul.f32 %v525, %v525
        %v534 = vmul.f32 %v526, %v526
        %v535 = vmul.f32 %v527, %v527
        %v536 = vmul.f32 %v528, %v528
        %v537 = vmul.f32 %v529, %v529
        %v538 = vmul.f32 %v530, %v530
        %v539 = vmul.f32 %v531, %v531
        %v540 = vmul.f32 %v532, %v532
        %v549 = vcombine.low %v533, %v534
        %v550 = vcombine.low %v535, %v536
        %v551 = vcombine.low %v537, %v538
        %v552 = vcombine.low %v539, %v540
        %v557 = vsel %vm439, %v549, 0.0
        %558 = vadd.xlane.f32.xlu0 %v557
        %v559 = vpop.xlane.xlu0 %558
        %v560 = vsel %vm439, %v550, 0.0
        %561 = vadd.xlane.f32.xlu0 %v560
        %v562 = vpop.xlane.xlu0 %561
        %v563 = vsel %vm439, %v551, 0.0
        %564 = vadd.xlane.f32.xlu0 %v563
        %v565 = vpop.xlane.xlu0 %564
        %v566 = vsel %vm439, %v552, 0.0
        %567 = vadd.xlane.f32.xlu0 %v566
        %v568 = vpop.xlane.xlu0 %567
        %v569 = vmul.f32 %v559, %v452
        %v570 = vmul.f32 %v562, %v452
        %v571 = vmul.f32 %v565, %v452
        %v572 = vmul.f32 %v568, %v452
        %v573 = vadd.f32 %v569, 1e-05
        %v574 = vadd.f32 %v570, 1e-05
        %v575 = vadd.f32 %v571, 1e-05
        %v576 = vadd.f32 %v572, 1e-05
        %v577 = vrsqrt.pop %v573
        %v578 = vrsqrt.pop %v574
        %v579 = vrsqrt.pop %v575
        %v580 = vrsqrt.pop %v576
        %v586 = vunpack.c.l.s4 839922192
        %v587 = vunpack.c.0.s8 %v586
        %v588 = vlaneseq
        %v589 = vshrl.u32 %v588, 7
        %v590 = vsub.s32 %v587, %v589
        %v591 = vrot.slane %v577, %v590
        %v593 = vunpack.c.l.s4 1985246804
        %v594 = vunpack.c.0.s8 %v593
        %v595 = vlaneseq
        %v596 = vshrl.u32 %v595, 7
        %v597 = vsub.s32 %v594, %v596
        %v598 = vrot.slane %v577, %v597
        %v600 = vunpack.c.l.s4 839922192
        %v601 = vunpack.c.0.s8 %v600
        %v602 = vlaneseq
        %v603 = vshrl.u32 %v602, 7
        %v604 = vsub.s32 %v601, %v603
        %v605 = vrot.slane %v578, %v604
        %v607 = vunpack.c.l.s4 1985246804
        %v608 = vunpack.c.0.s8 %v607
        %v609 = vlaneseq
        %v610 = vshrl.u32 %v609, 7
        %v611 = vsub.s32 %v608, %v610
        %v612 = vrot.slane %v578, %v611
        %v614 = vunpack.c.l.s4 839922192
        %v615 = vunpack.c.0.s8 %v614
        %v616 = vlaneseq
        %v617 = vshrl.u32 %v616, 7
        %v618 = vsub.s32 %v615, %v617
        %v619 = vrot.slane %v579, %v618
        %v621 = vunpack.c.l.s4 1985246804
        %v622 = vunpack.c.0.s8 %v621
        %v623 = vlaneseq
        %v624 = vshrl.u32 %v623, 7
        %v625 = vsub.s32 %v622, %v624
        %v626 = vrot.slane %v579, %v625
        %v628 = vunpack.c.l.s4 839922192
        %v629 = vunpack.c.0.s8 %v628
        %v630 = vlaneseq
        %v631 = vshrl.u32 %v630, 7
        %v632 = vsub.s32 %v629, %v631
        %v633 = vrot.slane %v580, %v632
        %v635 = vunpack.c.l.s4 1985246804
        %v636 = vunpack.c.0.s8 %v635
        %v637 = vlaneseq
        %v638 = vshrl.u32 %v637, 7
        %v639 = vsub.s32 %v636, %v638
        %v640 = vrot.slane %v580, %v639
        %v649 = vmul.f32 %v525, %v591
        %v650 = vmul.f32 %v526, %v598
        %v651 = vmul.f32 %v527, %v605
        %v652 = vmul.f32 %v528, %v612
        %v653 = vmul.f32 %v529, %v619
        %v654 = vmul.f32 %v530, %v626
        %v655 = vmul.f32 %v531, %v633
        %v656 = vmul.f32 %v532, %v640
        %v658 = vlaneseq
        %v659 = vshrl.u32 %v658, 7
        %v660 = vsub.s32 0, %v659
        %v661 = vrot.slane %v415, %v660
        %v663 = vcombine.high %v661, %v661
        %v665 = vmul.f32 %v649, %v661
        %v666 = vmul.f32 %v650, %v663
        %v667 = vmul.f32 %v651, %v661
        %v668 = vmul.f32 %v652, %v663
        %v669 = vmul.f32 %v653, %v661
        %v670 = vmul.f32 %v654, %v663
        %v671 = vmul.f32 %v655, %v661
        %v672 = vmul.f32 %v656, %v663
        %v674 = vlaneseq
        %v675 = vshrl.u32 %v674, 7
        %v676 = vsub.s32 0, %v675
        %v677 = vrot.slane %v416, %v676
        %v679 = vcombine.high %v677, %v677
        %v681 = vadd.f32 %v665, %v677
        %v682 = vadd.f32 %v666, %v679
        %v683 = vadd.f32 %v667, %v677
        %v684 = vadd.f32 %v668, %v679
        %v685 = vadd.f32 %v669, %v677
        %v686 = vadd.f32 %v670, %v679
        %v687 = vadd.f32 %v671, %v677
        %v688 = vadd.f32 %v672, %v679
        %v697 = vcombine.low %v681, %v682
        %v698 = vcombine.low %v683, %v684
        %v699 = vcombine.low %v685, %v686
        %v700 = vcombine.low %v687, %v688
        %v705 = vpack.c.bf16 %v698, %v697
        %v706 = vpack.c.bf16 %v700, %v699
        %v708 = vlaneseq
        %v709 = vshrl.u32 %v708, 7
        %v710 = vsub.s32 0, %v709
        %v711 = vrot.slane %v421, %v710
        %v717 = vunpack.c.l.b16 %v417
        %v718 = vunpack.c.l.b16 %v418
        %v719 = vunpack.c.l.b16 %v419
        %v720 = vunpack.c.l.b16 %v420
        %v721 = vpack.c.b16 %v718, %v717
        %v722 = vpack.c.b16 %v720, %v719
        %v726 = vsel %vm439, %v705, 0
        %v729 = vsel %vm439, %v706, 0
        %731 = vmatprep.subr.bf16.mxu0 0
        %732 = vmatpush1.bf16.msra.mxu0 %v721
        %733 = vmatprep.subr.bf16.mxu0 0
        %734 = vmatpush1.bf16.msra.mxu0 %v722
        %735 = vmatprep.subr.bf16.mxu0 0
        %736 = vmatpush1.bf16.msra.mxu0 0
        %737 = vmatprep.subr.bf16.mxu0 0
        %738 = vmatpush1.bf16.msra.mxu0 0
        %739 = vmatprep.subr.bf16.mxu0 0
        %740 = vmatpush1.bf16.msra.mxu0 0
        %741 = vmatprep.subr.bf16.mxu0 0
        %742 = vmatpush1.bf16.msra.mxu0 0
        %743 = vmatprep.subr.bf16.mxu0 0
        %744 = vmatpush1.bf16.msra.mxu0 0
        %745 = vmatprep.subr.bf16.mxu0 0
        %746 = vmatpush1.bf16.msra.mxu0 0
        %747 = vmatprep.subr.bf16.mxu0 0
        %748 = vmatpush1.bf16.msra.mxu0 0
        %749 = vmatprep.subr.bf16.mxu0 0
        %750 = vmatpush1.bf16.msra.mxu0 0
        %751 = vmatprep.subr.bf16.mxu0 0
        %752 = vmatpush1.bf16.msra.mxu0 0
        %753 = vmatprep.subr.bf16.mxu0 0
        %754 = vmatpush1.bf16.msra.mxu0 0
        %755 = vmatprep.subr.bf16.mxu0 0
        %756 = vmatpush1.bf16.msra.mxu0 0
        %757 = vmatprep.subr.bf16.mxu0 0
        %758 = vmatpush1.bf16.msra.mxu0 0
        %759 = vmatprep.subr.bf16.mxu0 0
        %760 = vmatpush1.bf16.msra.mxu0 0
        %761 = vmatprep.subr.bf16.mxu0 0
        %762 = vmatpush1.bf16.msra.mxu0 0
        %763 = vmatprep.mubr.bf16.mxu0 0
        %764 = vmatmul.mubr.bf16.gmra.mrb[0].mxu0 %v726
        %v765 = vpop.f32.mrb[0].mxu0
        %v766 = vadd.f32 %v711, %v765
        %v767 = vpop.f32.mrb[0].mxu0
        %v768 = vpop.f32.mrb[0].mxu0
        %v769 = vadd.f32 %v711, %v768
        %v770 = vpop.f32.mrb[0].mxu0
        %771 = vmatprep.mubr.bf16.mxu0 0
        %772 = vmatmul.mubr.bf16.gmra.mrb[0].mxu0 %v729
        %v773 = vpop.f32.mrb[0].mxu0
        %v774 = vadd.f32 %v711, %v773
        %v775 = vpop.f32.mrb[0].mxu0
        %v776 = vpop.f32.mrb[0].mxu0
        %v777 = vadd.f32 %v711, %v776
        %v778 = vpop.f32.mrb[0].mxu0
        %779 = vdwg.mxu0
        %v780 = vpack.c.bf16 %v769, %v766
        %v781 = vpack.c.bf16 %v777, %v774
        %783 = vrot.lane.b32.xlu0 %v780, 96
        %v784 = vpop.permute.xlu0 %783
        %vm785 = vcmask 130048
        %v787 = vsel %vm785, %v780, 0
        %v790 = vsel %vm785, %v784, 0
        %792 = vmatprep.subr.bf16.mxu0 0
        %793 = vmatpush1.bf16.xpose.msra.mxu0 %v790
        %794 = vmatprep.subr.bf16.mxu0 0
        %795 = vmatpush1.bf16.xpose.msra.mxu0 0
        %796 = vmatprep.subr.bf16.mxu0 0
        %797 = vmatpush1.bf16.xpose.msra.mxu0 0
        %798 = vmatprep.subr.bf16.mxu0 0
        %799 = vmatpush1.bf16.xpose.msra.mxu0 0
        %800 = vmatprep.subr.bf16.mxu0 0
        %801 = vmatpush1.bf16.xpose.msra.mxu0 0
        %802 = vmatprep.subr.bf16.mxu0 0
        %803 = vmatpush1.bf16.xpose.msra.mxu0 0
        %804 = vmatprep.subr.bf16.mxu0 0
        %805 = vmatpush1.bf16.xpose.msra.mxu0 0
        %806 = vmatprep.subr.bf16.mxu0 0
        %807 = vmatpush1.bf16.xpose.msra.mxu0 0
        %808 = vmatprep.subr.bf16.mxu0 0
        %809 = vmatpush1.bf16.xpose.msra.mxu0 0
        %810 = vmatprep.subr.bf16.mxu0 0
        %811 = vmatpush1.bf16.xpose.msra.mxu0 0
        %812 = vmatprep.subr.bf16.mxu0 0
        %813 = vmatpush1.bf16.xpose.msra.mxu0 0
        %814 = vmatprep.subr.bf16.mxu0 0
        %815 = vmatpush1.bf16.xpose.msra.mxu0 0
        %816 = vmatprep.subr.bf16.mxu0 0
        %817 = vmatpush1.bf16.xpose.msra.mxu0 0
        %818 = vmatprep.subr.bf16.mxu0 0
        %819 = vmatpush1.bf16.xpose.msra.mxu0 0
        %820 = vmatprep.subr.bf16.mxu0 0
        %821 = vmatpush1.bf16.xpose.msra.mxu0 0
        %822 = vmatprep.subr.bf16.mxu0 0
        %823 = vmatpush1.bf16.xpose.msra.mxu0 0
        %824 = vmatprep.mubr.bf16.mxu0 0
        %825 = vmatmul.mubr.bf16.gmra.mrb[0].mxu0 %v787
        %v826 = vpop.f32.mrb[0].mxu0
        %v827 = vadd.f32 %v427, %v826
        %v828 = vpop.f32.mrb[0].mxu0
        %v829 = vpop.f32.mrb[0].mxu0
        %v830 = vadd.f32 %v428, %v829
        %v831 = vpop.f32.mrb[0].mxu0
        %832 = vdwg.mxu0
        %834 = vrot.lane.b32.xlu0 %v781, 96
        %v835 = vpop.permute.xlu0 %834
        %v837 = vsel %vm785, %v781, 0
        %v840 = vsel %vm785, %v835, 0
        %842 = vmatprep.subr.bf16.mxu0 0
        %843 = vmatpush1.bf16.xpose.msra.mxu0 %v840
        %844 = vmatprep.subr.bf16.mxu0 0
        %845 = vmatpush1.bf16.xpose.msra.mxu0 0
        %846 = vmatprep.subr.bf16.mxu0 0
        %847 = vmatpush1.bf16.xpose.msra.mxu0 0
        %848 = vmatprep.subr.bf16.mxu0 0
        %849 = vmatpush1.bf16.xpose.msra.mxu0 0
        %850 = vmatprep.subr.bf16.mxu0 0
        %851 = vmatpush1.bf16.xpose.msra.mxu0 0
        %852 = vmatprep.subr.bf16.mxu0 0
        %853 = vmatpush1.bf16.xpose.msra.mxu0 0
        %854 = vmatprep.subr.bf16.mxu0 0
        %855 = vmatpush1.bf16.xpose.msra.mxu0 0
        %856 = vmatprep.subr.bf16.mxu0 0
        %857 = vmatpush1.bf16.xpose.msra.mxu0 0
        %858 = vmatprep.subr.bf16.mxu0 0
        %859 = vmatpush1.bf16.xpose.msra.mxu0 0
        %860 = vmatprep.subr.bf16.mxu0 0
        %861 = vmatpush1.bf16.xpose.msra.mxu0 0
        %862 = vmatprep.subr.bf16.mxu0 0
        %863 = vmatpush1.bf16.xpose.msra.mxu0 0
        %864 = vmatprep.subr.bf16.mxu0 0
        %865 = vmatpush1.bf16.xpose.msra.mxu0 0
        %866 = vmatprep.subr.bf16.mxu0 0
        %867 = vmatpush1.bf16.xpose.msra.mxu0 0
        %868 = vmatprep.subr.bf16.mxu0 0
        %869 = vmatpush1.bf16.xpose.msra.mxu0 0
        %870 = vmatprep.subr.bf16.mxu0 0
        %871 = vmatpush1.bf16.xpose.msra.mxu0 0
        %872 = vmatprep.subr.bf16.mxu0 0
        %873 = vmatpush1.bf16.xpose.msra.mxu0 0
        %874 = vmatprep.mubr.bf16.mxu0 0
        %875 = vmatmul.mubr.bf16.gmra.mrb[0].mxu0 %v837
        %v876 = vpop.f32.mrb[0].mxu0
        %v877 = vadd.f32 %v427, %v876
        %v878 = vpop.f32.mrb[0].mxu0
        %v879 = vpop.f32.mrb[0].mxu0
        %v880 = vadd.f32 %v428, %v879
        %v881 = vpop.f32.mrb[0].mxu0
        %882 = vdwg.mxu0
        %v883 = vsel %vm785, %v827, -inf
        %884 = vmax.xlane.f32.xlu0 %v883
        %v885 = vpop.xlane.xlu0 %884
        %v886 = vsel %vm785, %v830, -inf
        %887 = vmax.xlane.f32.xlu0 %v886
        %v888 = vpop.xlane.xlu0 %887
        %v889 = vsel %vm785, %v877, -inf
        %890 = vmax.xlane.f32.xlu0 %v889
        %v891 = vpop.xlane.xlu0 %890
        %v892 = vsel %vm785, %v880, -inf
        %893 = vmax.xlane.f32.xlu0 %v892
        %v894 = vpop.xlane.xlu0 %893
        %v895 = vsub.f32 %v827, %v885
        %v896 = vsub.f32 %v830, %v888
        %v897 = vsub.f32 %v877, %v891
        %v898 = vsub.f32 %v880, %v894
        %v899 = vmul.f32 %v895, 1.442695
        %v900 = vpow.pop %v899
        %v901 = vmul.f32 %v896, 1.442695
        %v902 = vpow.pop %v901
        %v903 = vmul.f32 %v897, 1.442695
        %v904 = vpow.pop %v903
        %v905 = vmul.f32 %v898, 1.442695
        %v906 = vpow.pop %v905
        %v907 = vsel %vm785, %v900, 0.0
        %908 = vadd.xlane.f32.xlu0 %v907
        %v909 = vpop.xlane.xlu0 %908
        %v910 = vsel %vm785, %v902, 0.0
        %911 = vadd.xlane.f32.xlu0 %v910
        %v912 = vpop.xlane.xlu0 %911
        %v913 = vsel %vm785, %v904, 0.0
        %914 = vadd.xlane.f32.xlu0 %v913
        %v915 = vpop.xlane.xlu0 %914
        %v916 = vsel %vm785, %v906, 0.0
        %917 = vadd.xlane.f32.xlu0 %v916
        %v918 = vpop.xlane.xlu0 %917
        %v919 = vrcp.pop %v909
        %v920 = vrcp.pop %v912
        %v921 = vrcp.pop %v915
        %v922 = vrcp.pop %v918
        %v923 = vmul.f32 %v900, %v919
        %v924 = vmul.f32 %v902, %v920
        %v925 = vmul.f32 %v904, %v921
        %v926 = vmul.f32 %v906, %v922
        %v927 = vpack.c.bf16 %v924, %v923
        %v928 = vpack.c.bf16 %v926, %v925
        %929 = vrot.lane.b32.xlu0 %v780, 64
        %v930 = vpop.permute.xlu0 %929
        %v933 = vsel %vm785, %v927, 0
        %935 = vmatprep.subr.bf16.mxu0 0
        %936 = vmatpush1.bf16.msra.mxu0 %v930
        %937 = vmatprep.subr.bf16.mxu0 0
        %938 = vmatpush1.bf16.msra.mxu0 0
        %939 = vmatprep.subr.bf16.mxu0 0
        %940 = vmatpush1.bf16.msra.mxu0 0
        %941 = vmatprep.subr.bf16.mxu0 0
        %942 = vmatpush1.bf16.msra.mxu0 0
        %943 = vmatprep.subr.bf16.mxu0 0
        %944 = vmatpush1.bf16.msra.mxu0 0
        %945 = vmatprep.subr.bf16.mxu0 0
        %946 = vmatpush1.bf16.msra.mxu0 0
        %947 = vmatprep.subr.bf16.mxu0 0
        %948 = vmatpush1.bf16.msra.mxu0 0
        %949 = vmatprep.subr.bf16.mxu0 0
        %950 = vmatpush1.bf16.msra.mxu0 0
        %951 = vmatprep.subr.bf16.mxu0 0
        %952 = vmatpush1.bf16.msra.mxu0 0
        %953 = vmatprep.subr.bf16.mxu0 0
        %954 = vmatpush1.bf16.msra.mxu0 0
        %955 = vmatprep.subr.bf16.mxu0 0
        %956 = vmatpush1.bf16.msra.mxu0 0
        %957 = vmatprep.subr.bf16.mxu0 0
        %958 = vmatpush1.bf16.msra.mxu0 0
        %959 = vmatprep.subr.bf16.mxu0 0
        %960 = vmatpush1.bf16.msra.mxu0 0
        %961 = vmatprep.subr.bf16.mxu0 0
        %962 = vmatpush1.bf16.msra.mxu0 0
        %963 = vmatprep.subr.bf16.mxu0 0
        %964 = vmatpush1.bf16.msra.mxu0 0
        %965 = vmatprep.subr.bf16.mxu0 0
        %966 = vmatpush1.bf16.msra.mxu0 0
        %967 = vmatprep.mubr.bf16.mxu0 0
        %968 = vmatmul.mubr.bf16.gmra.mrb[0].mxu0 %v933
        %v969 = vpop.f32.mrb[0].mxu0
        %v970 = vadd.f32 0.0, %v969
        %v971 = vpop.f32.mrb[0].mxu0
        %v972 = vpop.f32.mrb[0].mxu0
        %v973 = vadd.f32 0.0, %v972
        %v974 = vpop.f32.mrb[0].mxu0
        %975 = vdwg.mxu0
        %976 = vrot.lane.b32.xlu0 %v781, 64
        %v977 = vpop.permute.xlu0 %976
        %v980 = vsel %vm785, %v928, 0
        %982 = vmatprep.subr.bf16.mxu0 0
        %983 = vmatpush1.bf16.msra.mxu0 %v977
        %984 = vmatprep.subr.bf16.mxu0 0
        %985 = vmatpush1.bf16.msra.mxu0 0
        %986 = vmatprep.subr.bf16.mxu0 0
        %987 = vmatpush1.bf16.msra.mxu0 0
        %988 = vmatprep.subr.bf16.mxu0 0
        %989 = vmatpush1.bf16.msra.mxu0 0
        %990 = vmatprep.subr.bf16.mxu0 0
        %991 = vmatpush1.bf16.msra.mxu0 0
        %992 = vmatprep.subr.bf16.mxu0 0
        %993 = vmatpush1.bf16.msra.mxu0 0
        %994 = vmatprep.subr.bf16.mxu0 0
        %995 = vmatpush1.bf16.msra.mxu0 0
        %996 = vmatprep.subr.bf16.mxu0 0
        %997 = vmatpush1.bf16.msra.mxu0 0
        %998 = vmatprep.subr.bf16.mxu0 0
        %999 = vmatpush1.bf16.msra.mxu0 0
        %1000 = vmatprep.subr.bf16.mxu0 0
        %1001 = vmatpush1.bf16.msra.mxu0 0
        %1002 = vmatprep.subr.bf16.mxu0 0
        %1003 = vmatpush1.bf16.msra.mxu0 0
        %1004 = vmatprep.subr.bf16.mxu0 0
        %1005 = vmatpush1.bf16.msra.mxu0 0
        %1006 = vmatprep.subr.bf16.mxu0 0
        %1007 = vmatpush1.bf16.msra.mxu0 0
        %1008 = vmatprep.subr.bf16.mxu0 0
        %1009 = vmatpush1.bf16.msra.mxu0 0
        %1010 = vmatprep.subr.bf16.mxu0 0
        %1011 = vmatpush1.bf16.msra.mxu0 0
        %1012 = vmatprep.subr.bf16.mxu0 0
        %1013 = vmatpush1.bf16.msra.mxu0 0
        %1014 = vmatprep.mubr.bf16.mxu0 0
        %1015 = vmatmul.mubr.bf16.gmra.mrb[0].mxu0 %v980
        %v1016 = vpop.f32.mrb[0].mxu0
        %v1017 = vadd.f32 0.0, %v1016
        %v1018 = vpop.f32.mrb[0].mxu0
        %v1019 = vpop.f32.mrb[0].mxu0
        %v1020 = vadd.f32 0.0, %v1019
        %v1021 = vpop.f32.mrb[0].mxu0
        %1022 = vdwg.mxu0
        %1023 = vrot.lane.b32.xlu0 %v780, 112
        %v1024 = vpop.permute.xlu0 %1023
        %1025 = vrot.lane.b32.xlu0 %v780, 80
        %v1026 = vpop.permute.xlu0 %1025
        %v1028 = vsel %vm785, %v1024, 0
        %v1031 = vsel %vm785, %v1026, 0
        %1033 = vmatprep.subr.bf16.mxu0 0
        %1034 = vmatpush1.bf16.xpose.msra.mxu0 %v1031
        %1035 = vmatprep.subr.bf16.mxu0 0
        %1036 = vmatpush1.bf16.xpose.msra.mxu0 0
        %1037 = vmatprep.subr.bf16.mxu0 0
        %1038 = vmatpush1.bf16.xpose.msra.mxu0 0
        %1039 = vmatprep.subr.bf16.mxu0 0
        %1040 = vmatpush1.bf16.xpose.msra.mxu0 0
        %1041 = vmatprep.subr.bf16.mxu0 0
        %1042 = vmatpush1.bf16.xpose.msra.mxu0 0
        %1043 = vmatprep.subr.bf16.mxu0 0
        %1044 = vmatpush1.bf16.xpose.msra.mxu0 0
        %1045 = vmatprep.subr.bf16.mxu0 0
        %1046 = vmatpush1.bf16.xpose.msra.mxu0 0
        %1047 = vmatprep.subr.bf16.mxu0 0
        %1048 = vmatpush1.bf16.xpose.msra.mxu0 0
        %1049 = vmatprep.subr.bf16.mxu0 0
        %1050 = vmatpush1.bf16.xpose.msra.mxu0 0
        %1051 = vmatprep.subr.bf16.mxu0 0
        %1052 = vmatpush1.bf16.xpose.msra.mxu0 0
        %1053 = vmatprep.subr.bf16.mxu0 0
        %1054 = vmatpush1.bf16.xpose.msra.mxu0 0
        %1055 = vmatprep.subr.bf16.mxu0 0
        %1056 = vmatpush1.bf16.xpose.msra.mxu0 0
        %1057 = vmatprep.subr.bf16.mxu0 0
        %1058 = vmatpush1.bf16.xpose.msra.mxu0 0
        %1059 = vmatprep.subr.bf16.mxu0 0
        %1060 = vmatpush1.bf16.xpose.msra.mxu0 0
        %1061 = vmatprep.subr.bf16.mxu0 0
        %1062 = vmatpush1.bf16.xpose.msra.mxu0 0
        %1063 = vmatprep.subr.bf16.mxu0 0
        %1064 = vmatpush1.bf16.xpose.msra.mxu0 0
        %1065 = vmatprep.mubr.bf16.mxu0 0
        %1066 = vmatmul.mubr.bf16.gmra.mrb[0].mxu0 %v1028
        %v1067 = vpop.f32.mrb[0].mxu0
        %v1068 = vadd.f32 %v429, %v1067
        %v1069 = vpop.f32.mrb[0].mxu0
        %v1070 = vpop.f32.mrb[0].mxu0
        %v1071 = vadd.f32 %v430, %v1070
        %v1072 = vpop.f32.mrb[0].mxu0
        %1073 = vdwg.mxu0
        %1074 = vrot.lane.b32.xlu0 %v781, 112
        %v1075 = vpop.permute.xlu0 %1074
        %1076 = vrot.lane.b32.xlu0 %v781, 80
        %v1077 = vpop.permute.xlu0 %1076
        %v1079 = vsel %vm785, %v1075, 0
        %v1082 = vsel %vm785, %v1077, 0
        %1084 = vmatprep.subr.bf16.mxu0 0
        %1085 = vmatpush1.bf16.xpose.msra.mxu0 %v1082
        %1086 = vmatprep.subr.bf16.mxu0 0
        %1087 = vmatpush1.bf16.xpose.msra.mxu0 0
        %1088 = vmatprep.subr.bf16.mxu0 0
        %1089 = vmatpush1.bf16.xpose.msra.mxu0 0
        %1090 = vmatprep.subr.bf16.mxu0 0
        %1091 = vmatpush1.bf16.xpose.msra.mxu0 0
        %1092 = vmatprep.subr.bf16.mxu0 0
        %1093 = vmatpush1.bf16.xpose.msra.mxu0 0
        %1094 = vmatprep.subr.bf16.mxu0 0
        %1095 = vmatpush1.bf16.xpose.msra.mxu0 0
        %1096 = vmatprep.subr.bf16.mxu0 0
        %1097 = vmatpush1.bf16.xpose.msra.mxu0 0
        %1098 = vmatprep.subr.bf16.mxu0 0
        %1099 = vmatpush1.bf16.xpose.msra.mxu0 0
        %1100 = vmatprep.subr.bf16.mxu0 0
        %1101 = vmatpush1.bf16.xpose.msra.mxu0 0
        %1102 = vmatprep.subr.bf16.mxu0 0
        %1103 = vmatpush1.bf16.xpose.msra.mxu0 0
        %1104 = vmatprep.subr.bf16.mxu0 0
        %1105 = vmatpush1.bf16.xpose.msra.mxu0 0
        %1106 = vmatprep.subr.bf16.mxu0 0
        %1107 = vmatpush1.bf16.xpose.msra.mxu0 0
        %1108 = vmatprep.subr.bf16.mxu0 0
        %1109 = vmatpush1.bf16.xpose.msra.mxu0 0
        %1110 = vmatprep.subr.bf16.mxu0 0
        %1111 = vmatpush1.bf16.xpose.msra.mxu0 0
        %1112 = vmatprep.subr.bf16.mxu0 0
        %1113 = vmatpush1.bf16.xpose.msra.mxu0 0
        %1114 = vmatprep.subr.bf16.mxu0 0
        %1115 = vmatpush1.bf16.xpose.msra.mxu0 0
        %1116 = vmatprep.mubr.bf16.mxu0 0
        %1117 = vmatmul.mubr.bf16.gmra.mrb[0].mxu0 %v1079
        %v1118 = vpop.f32.mrb[0].mxu0
        %v1119 = vadd.f32 %v429, %v1118
        %v1120 = vpop.f32.mrb[0].mxu0
        %v1121 = vpop.f32.mrb[0].mxu0
        %v1122 = vadd.f32 %v430, %v1121
        %v1123 = vpop.f32.mrb[0].mxu0
        %1124 = vdwg.mxu0
        %v1125 = vsel %vm785, %v1068, -inf
        %1126 = vmax.xlane.f32.xlu0 %v1125
        %v1127 = vpop.xlane.xlu0 %1126
        %v1128 = vsel %vm785, %v1071, -inf
        %1129 = vmax.xlane.f32.xlu0 %v1128
        %v1130 = vpop.xlane.xlu0 %1129
        %v1131 = vsel %vm785, %v1119, -inf
        %1132 = vmax.xlane.f32.xlu0 %v1131
        %v1133 = vpop.xlane.xlu0 %1132
        %v1134 = vsel %vm785, %v1122, -inf
        %1135 = vmax.xlane.f32.xlu0 %v1134
        %v1136 = vpop.xlane.xlu0 %1135
        %v1137 = vsub.f32 %v1068, %v1127
        %v1138 = vsub.f32 %v1071, %v1130
        %v1139 = vsub.f32 %v1119, %v1133
        %v1140 = vsub.f32 %v1122, %v1136
        %v1141 = vmul.f32 %v1137, 1.442695
        %v1142 = vpow.pop %v1141
        %v1143 = vmul.f32 %v1138, 1.442695
        %v1144 = vpow.pop %v1143
        %v1145 = vmul.f32 %v1139, 1.442695
        %v1146 = vpow.pop %v1145
        %v1147 = vmul.f32 %v1140, 1.442695
        %v1148 = vpow.pop %v1147
        %v1149 = vsel %vm785, %v1142, 0.0
        %1150 = vadd.xlane.f32.xlu0 %v1149
        %v1151 = vpop.xlane.xlu0 %1150
        %v1152 = vsel %vm785, %v1144, 0.0
        %1153 = vadd.xlane.f32.xlu0 %v1152
        %v1154 = vpop.xlane.xlu0 %1153
        %v1155 = vsel %vm785, %v1146, 0.0
        %1156 = vadd.xlane.f32.xlu0 %v1155
        %v1157 = vpop.xlane.xlu0 %1156
        %v1158 = vsel %vm785, %v1148, 0.0
        %1159 = vadd.xlane.f32.xlu0 %v1158
        %v1160 = vpop.xlane.xlu0 %1159
        %v1161 = vrcp.pop %v1151
        %v1162 = vrcp.pop %v1154
        %v1163 = vrcp.pop %v1157
        %v1164 = vrcp.pop %v1160
        %v1165 = vmul.f32 %v1142, %v1161
        %v1166 = vmul.f32 %v1144, %v1162
        %v1167 = vmul.f32 %v1146, %v1163
        %v1168 = vmul.f32 %v1148, %v1164
        %v1169 = vpack.c.bf16 %v1166, %v1165
        %v1170 = vpack.c.bf16 %v1168, %v1167
        %1171 = vrot.lane.b32.xlu0 %v780, 48
        %v1172 = vpop.permute.xlu0 %1171
        %v1175 = vsel %vm785, %v1169, 0
        %1177 = vmatprep.subr.bf16.mxu0 0
        %1178 = vmatpush1.bf16.msra.mxu0 %v1172
        %1179 = vmatprep.subr.bf16.mxu0 0
        %1180 = vmatpush1.bf16.msra.mxu0 0
        %1181 = vmatprep.subr.bf16.mxu0 0
        %1182 = vmatpush1.bf16.msra.mxu0 0
        %1183 = vmatprep.subr.bf16.mxu0 0
        %1184 = vmatpush1.bf16.msra.mxu0 0
        %1185 = vmatprep.subr.bf16.mxu0 0
        %1186 = vmatpush1.bf16.msra.mxu0 0
        %1187 = vmatprep.subr.bf16.mxu0 0
        %1188 = vmatpush1.bf16.msra.mxu0 0
        %1189 = vmatprep.subr.bf16.mxu0 0
        %1190 = vmatpush1.bf16.msra.mxu0 0
        %1191 = vmatprep.subr.bf16.mxu0 0
        %1192 = vmatpush1.bf16.msra.mxu0 0
        %1193 = vmatprep.subr.bf16.mxu0 0
        %1194 = vmatpush1.bf16.msra.mxu0 0
        %1195 = vmatprep.subr.bf16.mxu0 0
        %1196 = vmatpush1.bf16.msra.mxu0 0
        %1197 = vmatprep.subr.bf16.mxu0 0
        %1198 = vmatpush1.bf16.msra.mxu0 0
        %1199 = vmatprep.subr.bf16.mxu0 0
        %1200 = vmatpush1.bf16.msra.mxu0 0
        %1201 = vmatprep.subr.bf16.mxu0 0
        %1202 = vmatpush1.bf16.msra.mxu0 0
        %1203 = vmatprep.subr.bf16.mxu0 0
        %1204 = vmatpush1.bf16.msra.mxu0 0
        %1205 = vmatprep.subr.bf16.mxu0 0
        %1206 = vmatpush1.bf16.msra.mxu0 0
        %1207 = vmatprep.subr.bf16.mxu0 0
        %1208 = vmatpush1.bf16.msra.mxu0 0
        %1209 = vmatprep.mubr.bf16.mxu0 0
        %1210 = vmatmul.mubr.bf16.gmra.mrb[0].mxu0 %v1175
        %v1211 = vpop.f32.mrb[0].mxu0
        %v1212 = vadd.f32 0.0, %v1211
        %v1213 = vpop.f32.mrb[0].mxu0
        %v1214 = vpop.f32.mrb[0].mxu0
        %v1215 = vadd.f32 0.0, %v1214
        %v1216 = vpop.f32.mrb[0].mxu0
        %1217 = vdwg.mxu0
        %1218 = vrot.lane.b32.xlu0 %v781, 48
        %v1219 = vpop.permute.xlu0 %1218
        %v1222 = vsel %vm785, %v1170, 0
        %1224 = vmatprep.subr.bf16.mxu0 0
        %1225 = vmatpush1.bf16.msra.mxu0 %v1219
        %1226 = vmatprep.subr.bf16.mxu0 0
        %1227 = vmatpush1.bf16.msra.mxu0 0
        %1228 = vmatprep.subr.bf16.mxu0 0
        %1229 = vmatpush1.bf16.msra.mxu0 0
        %1230 = vmatprep.subr.bf16.mxu0 0
        %1231 = vmatpush1.bf16.msra.mxu0 0
        %1232 = vmatprep.subr.bf16.mxu0 0
        %1233 = vmatpush1.bf16.msra.mxu0 0
        %1234 = vmatprep.subr.bf16.mxu0 0
        %1235 = vmatpush1.bf16.msra.mxu0 0
        %1236 = vmatprep.subr.bf16.mxu0 0
        %1237 = vmatpush1.bf16.msra.mxu0 0
        %1238 = vmatprep.subr.bf16.mxu0 0
        %1239 = vmatpush1.bf16.msra.mxu0 0
        %1240 = vmatprep.subr.bf16.mxu0 0
        %1241 = vmatpush1.bf16.msra.mxu0 0
        %1242 = vmatprep.subr.bf16.mxu0 0
        %1243 = vmatpush1.bf16.msra.mxu0 0
        %1244 = vmatprep.subr.bf16.mxu0 0
        %1245 = vmatpush1.bf16.msra.mxu0 0
        %1246 = vmatprep.subr.bf16.mxu0 0
        %1247 = vmatpush1.bf16.msra.mxu0 0
        %1248 = vmatprep.subr.bf16.mxu0 0
        %1249 = vmatpush1.bf16.msra.mxu0 0
        %1250 = vmatprep.subr.bf16.mxu0 0
        %1251 = vmatpush1.bf16.msra.mxu0 0
        %1252 = vmatprep.subr.bf16.mxu0 0
        %1253 = vmatpush1.bf16.msra.mxu0 0
        %1254 = vmatprep.subr.bf16.mxu0 0
        %1255 = vmatpush1.bf16.msra.mxu0 0
        %1256 = vmatprep.mubr.bf16.mxu0 0
        %1257 = vmatmul.mubr.bf16.gmra.mrb[0].mxu0 %v1222
        %v1258 = vpop.f32.mrb[0].mxu0
        %v1259 = vadd.f32 0.0, %v1258
        %v1260 = vpop.f32.mrb[0].mxu0
        %v1261 = vpop.f32.mrb[0].mxu0
        %v1262 = vadd.f32 0.0, %v1261
        %v1263 = vpop.f32.mrb[0].mxu0
        %1264 = vdwg.mxu0
        %1269 = vrot.lane.b32.xlu0 %v1212, 16
        %v1270 = vpop.permute.xlu0 %1269
        %1271 = vrot.lane.b32.xlu0 %v1215, 16
        %v1272 = vpop.permute.xlu0 %1271
        %1273 = vrot.lane.b32.xlu0 %v1259, 16
        %v1274 = vpop.permute.xlu0 %1273
        %1275 = vrot.lane.b32.xlu0 %v1262, 16
        %v1276 = vpop.permute.xlu0 %1275
        %v1281 = vsel %vm785, %v970, %v1270
        %v1282 = vsel %vm785, %v973, %v1272
        %v1283 = vsel %vm785, %v1017, %v1274
        %v1284 = vsel %vm785, %v1020, %v1276
        %v1285 = vpack.c.bf16 %v1282, %v1281
        %v1286 = vpack.c.bf16 %v1284, %v1283
        %v1288 = vlaneseq
        %v1289 = vshrl.u32 %v1288, 7
        %v1290 = vsub.s32 0, %v1289
        %v1291 = vrot.slane %v426, %v1290
        %v1297 = vunpack.c.l.b16 %v422
        %v1298 = vunpack.c.l.b16 %v423
        %v1299 = vunpack.c.l.b16 %v424
        %v1300 = vunpack.c.l.b16 %v425
        %v1301 = vpack.c.b16 %v1298, %v1297
        %v1302 = vpack.c.b16 %v1300, %v1299
        %v1306 = vsel %vm439, %v1285, 0
        %v1309 = vsel %vm439, %v1286, 0
        %1311 = vmatprep.subr.bf16.mxu0 0
        %1312 = vmatpush1.bf16.msra.mxu0 %v1301
        %1313 = vmatprep.subr.bf16.mxu0 0
        %1314 = vmatpush1.bf16.msra.mxu0 %v1302
        %1315 = vmatprep.subr.bf16.mxu0 0
        %1316 = vmatpush1.bf16.msra.mxu0 0
        %1317 = vmatprep.subr.bf16.mxu0 0
        %1318 = vmatpush1.bf16.msra.mxu0 0
        %1319 = vmatprep.subr.bf16.mxu0 0
        %1320 = vmatpush1.bf16.msra.mxu0 0
        %1321 = vmatprep.subr.bf16.mxu0 0
        %1322 = vmatpush1.bf16.msra.mxu0 0
        %1323 = vmatprep.subr.bf16.mxu0 0
        %1324 = vmatpush1.bf16.msra.mxu0 0
        %1325 = vmatprep.subr.bf16.mxu0 0
        %1326 = vmatpush1.bf16.msra.mxu0 0
        %1327 = vmatprep.subr.bf16.mxu0 0
        %1328 = vmatpush1.bf16.msra.mxu0 0
        %1329 = vmatprep.subr.bf16.mxu0 0
        %1330 = vmatpush1.bf16.msra.mxu0 0
        %1331 = vmatprep.subr.bf16.mxu0 0
        %1332 = vmatpush1.bf16.msra.mxu0 0
        %1333 = vmatprep.subr.bf16.mxu0 0
        %1334 = vmatpush1.bf16.msra.mxu0 0
        %1335 = vmatprep.subr.bf16.mxu0 0
        %1336 = vmatpush1.bf16.msra.mxu0 0
        %1337 = vmatprep.subr.bf16.mxu0 0
        %1338 = vmatpush1.bf16.msra.mxu0 0
        %1339 = vmatprep.subr.bf16.mxu0 0
        %1340 = vmatpush1.bf16.msra.mxu0 0
        %1341 = vmatprep.subr.bf16.mxu0 0
        %1342 = vmatpush1.bf16.msra.mxu0 0
        %1343 = vmatprep.mubr.bf16.mxu0 0
        %1344 = vmatmul.mubr.bf16.gmra.mrb[0].mxu0 %v1306
        %v1345 = vpop.f32.mrb[0].mxu0
        %v1346 = vadd.f32 %v1291, %v1345
        %v1347 = vpop.f32.mrb[0].mxu0
        %v1348 = vpop.f32.mrb[0].mxu0
        %v1349 = vadd.f32 %v1291, %v1348
        %v1350 = vpop.f32.mrb[0].mxu0
        %1351 = vmatprep.mubr.bf16.mxu0 0
        %1352 = vmatmul.mubr.bf16.gmra.mrb[0].mxu0 %v1309
        %v1353 = vpop.f32.mrb[0].mxu0
        %v1354 = vadd.f32 %v1291, %v1353
        %v1355 = vpop.f32.mrb[0].mxu0
        %v1356 = vpop.f32.mrb[0].mxu0
        %v1357 = vadd.f32 %v1291, %v1356
        %v1358 = vpop.f32.mrb[0].mxu0
        %1359 = vdwg.mxu0
        %v1364 = vcombine.high %v1346, %v1346
        %v1365 = vcombine.high %v1349, %v1349
        %v1366 = vcombine.high %v1354, %v1354
        %v1367 = vcombine.high %v1357, %v1357
        %v1368 = vcombine.low %v1346, %v1354
        %v1369 = vcombine.low %v1364, %v1366
        %v1370 = vcombine.low %v1349, %v1357
        %v1371 = vcombine.low %v1365, %v1367
        %1376 = vst.msk [vmem:[%s395] sm:$0xff] %vm439, %v1368
        %1377 = vst.msk [vmem:[%s395 + $0x8] sm:$0xff] %vm439, %v1369
        %1378 = vst.msk [vmem:[%s395 + $0x10] sm:$0xff] %vm439, %v1370
        %1379 = vst.msk [vmem:[%s395 + $0x18] sm:$0xff] %vm439, %v1371
        %s1380 = sand.u32 %s235, 1
        %s1381 = scalar_lea.sflag [#allocation4], %s1380
        %s1382 = sand.u32 %s235, 1
        %s1383 = smul.addr %s1382, 32
        %s1384 = scalar_lea.vmem [#allocation10], %s1383
        // Predicated region
        $region69: #{tpu_custom_call.1} parent=51 // pred_check
          %p1385 = pneg %p245
        $region70: #{tpu_custom_call.1} parent=51 // pred_check_branch
          %1387 = sbr.rel (%p1385) target = $region72
        $region71: #{tpu_custom_call.1} parent=51 // pred_region
          %s1388 = smul.u32 4, %s33
          %s1390 = ssub.s32 512, 512
          %1391 = vsyncadd %s1381, %s1390
          %s1392 = sadd.s32 %s34, %s1388
          %s1393 = smul.addr %s32, 8
          %s1394 = sadd.s32 %s1392, %s1393
          %s1395 = smul.addr %s1394, 128
          %s1396 = scalar_lea.hbm %s8, %s1395
          %s1397 = sshll.u32 %s1384, 4
          %s1398 = int_to_ptr.vmem [resolvable:$true] %s1397
          %1403 = dma.vmem_to_hbm [thread:$0]  %s1398, 512, %s1396, %s1381, 128, 128, 8
        $region72: #{tpu_custom_call.1} parent=51 // pred_fallthru
          _
      $region52: #{tpu_custom_call.1} parent=5 // pred_fallthru
        _
      %p1404 = scmp.le.s32.totalorder 2, %s22
      // Predicated region
      $region73: #{tpu_custom_call.1} parent=5 // pred_check
        %p1405 = pneg %p1404
      $region74: #{tpu_custom_call.1} parent=5 // pred_check_branch
        %1407 = sbr.rel (%p1405) target = $region76
      $region75: #{tpu_custom_call.1} parent=5 // pred_region
        %s1408 = ssub.s32 %s22, 2
        // Predicated region
        $region77: #{tpu_custom_call.1} parent=75 // pred_check
          %p1409 = pneg %p251
        $region78: #{tpu_custom_call.1} parent=75 // pred_check_branch
          %1411 = sbr.rel (%p1409) target = $region80
        $region79: #{tpu_custom_call.1} parent=75 // pred_region
          %s1412 = sand.u32 %s236, 1
          %s1413 = scalar_lea.sflag [#allocation4], %s1412
          %s1414 = sand.u32 %s236, 1
          %s1415 = smul.addr %s1414, 32
          %s1416 = scalar_lea.vmem [#allocation10], %s1415
          %1417 = dma.done %s1413, 512
        $region80: #{tpu_custom_call.1} parent=75 // pred_fallthru
          _
      $region76: #{tpu_custom_call.1} parent=5 // pred_fallthru
        _
    $region6: #{tpu_custom_call.1} parent=1 // loop_footer
      %s26 = sadd.s32 1, %s22
    $region7: #{tpu_custom_call.1} parent=1 // loop_footer_branch
      %21 = sbr.rel target = $region3
    $region8: #{tpu_custom_call.1} parent=1 // loop_exit
      _
    %1418 = vsyncpa [#allocation3], 1
    %s1419 = scalar_lea.sflag [#allocation3], 1
    %1420 = vsyncpa %s1419, 1
    %1421 = vsyncpa [#allocation6], 1
    %1422 = vsyncpa [#allocation9], 1
    %1423 = vsyncpa [#allocation4], 1
    %s1424 = scalar_lea.sflag [#allocation4], 1
    %1425 = vsyncpa %s1424, 1

</llo_original>
